<compile_context>
chip_gen: v7x
topology: tpu7x:2x2x1
jax: 0.10.0
libtpu: 0.0.40
codegen_flags: <defaults>
</compile_context>

<pallas_src>
import functools

import jax
import jax.numpy as jnp
from jax.experimental import pallas as pl
from jax.experimental.pallas import tpu as pltpu

LANE = 128                           # TPU lane width; channel dims padded to this
COMPUTE_DTYPE = jnp.bfloat16         # native MXU input dtype; accumulation is f32
VMEM_LIMIT_BYTES = 48 * 1024 * 1024  # > 16/32 MiB scoped default, < v7x 64 MiB


def _round_up(x, m):
    return (x + m - 1) // m * m


def _pad2(m, rows, cols):
    return jnp.pad(m, ((0, rows - m.shape[0]), (0, cols - m.shape[1])))


def _pad_last(v, target):
    return jnp.pad(v, (0, target - v.shape[0]))


# ----------------------------- Pallas kernels ------------------------------- #

def _mm_bias_kernel(x_ref, w_ref, b_ref, *rest, relu, has_residual):
    """y = [relu]( x @ w + bias [+ residual] ); BN scale pre-folded into w."""
    if has_residual:
        r_ref, o_ref = rest
    else:
        (o_ref,) = rest
    acc = jnp.dot(x_ref[...], w_ref[...], preferred_element_type=jnp.float32)
    y = acc + b_ref[...]
    if has_residual:
        y = y + r_ref[...].astype(jnp.float32)
    if relu:
        y = jnp.maximum(y, 0.0)
    o_ref[...] = y.astype(o_ref.dtype)


def matmul_bias_act(x, w, bias, residual=None, relu=True, tm=256):
    """Fused (x @ w) + bias (+ residual) (+ relu).

    x: (M, K) bf16, w: (K, N) bf16 (BN scale folded in), bias: (N,) f32,
    residual: (M, N) bf16 or None.  K, N must be multiples of 128 (lane-dense).
    Rows are padded so the row grid divides evenly; padded rows are sliced off.
    """
    M, K = x.shape
    N = w.shape[1]
    assert K % LANE == 0 and N % LANE == 0, (K, N)
    if residual is not None:
        assert residual.shape == (M, N), (residual.shape, M, N)

    # Large row tile (amortize ~600-cycle/step overhead), multiple of 8; shrink it
    # if it would pad M by more than half a tile.
    tm = _round_up(min(tm, _round_up(M, 8)), 8)
    while tm > 64 and _round_up(M, tm) - M > tm // 2:
        tm //= 2
    Mp = _round_up(M, tm)
    if Mp != M:
        x = jnp.pad(x, ((0, Mp - M), (0, 0)))
        if residual is not None:
            residual = jnp.pad(residual, ((0, Mp - M), (0, 0)))

    bias2 = bias.astype(jnp.float32).reshape(1, N)

    in_specs = [
        pl.BlockSpec((tm, K), lambda i: (i, 0)),   # row tile of x
        pl.BlockSpec((K, N), lambda i: (0, 0)),    # full scale-folded weight, resident
        pl.BlockSpec((1, N), lambda i: (0, 0)),    # folded BN bias
    ]
    args = [x, w, bias2]
    if residual is not None:
        in_specs.append(pl.BlockSpec((tm, N), lambda i: (i, 0)))
        args.append(residual)

    bytes_accessed = sum(int(a.size) * a.dtype.itemsize for a in args) + Mp * N * 2
    cost = pl.CostEstimate(flops=2 * Mp * K * N, transcendentals=0,
                           bytes_accessed=bytes_accessed)

    kernel = functools.partial(_mm_bias_kernel, relu=relu,
                               has_residual=residual is not None)
    out = pl.pallas_call(
        kernel,
        out_shape=jax.ShapeDtypeStruct((Mp, N), COMPUTE_DTYPE),
        grid=(Mp // tm,),
        in_specs=in_specs,
        out_specs=pl.BlockSpec((tm, N), lambda i: (i, 0)),
        compiler_params=pltpu.CompilerParams(
            dimension_semantics=("parallel",),
            vmem_limit_bytes=VMEM_LIMIT_BYTES),
        cost_estimate=cost,
    )(*args)
    return out[:M]


def _conv3x3_kernel(x_ref, w_ref, b_ref, o_ref, acc_ref, *, taps, mo, relu):
    # 9 tap matmuls over contiguous row-windows of the flattened phase images,
    # accumulated in a VMEM f32 scratch; bias + ReLU epilogue, bf16 store.
    for t, (q, off) in enumerate(taps):
        xt = x_ref[0, q, pl.ds(off, mo), :]
        contrib = jnp.dot(xt, w_ref[t], preferred_element_type=jnp.float32)
        if t == 0:
            acc_ref[...] = contrib
        else:
            acc_ref[...] += contrib
    y = acc_ref[...] + b_ref[...]
    if relu:
        y = jnp.maximum(y, 0.0)
    o_ref[0, :, :] = y.astype(o_ref.dtype)


def conv3x3_bn_act(x_nhwc, w9, bias, stride, relu=True):
    """3x3 conv (padding=1, stride) + folded-BN bias + ReLU, without im2col in HBM.

    x_nhwc: (N, H, W, C) bf16 with C % 128 == 0.
    w9:     (9, C, C2) bf16 (tap order kh*3+kw, BN scale folded in).
    bias:   (C2,) f32.   Returns (N, Ho, Wo, C2) bf16.

    The input is decomposed into stride^2 phase images, zero-padded and flattened in
    glue (total traffic ~1x of the activation).  Each of the 9 taps then reads a
    contiguous row-window of one phase, so the whole conv is 9 accumulated matmuls
    inside a single kernel invocation per image.
    """
    n, h, w, c = x_nhwc.shape
    c2 = w9.shape[2]
    assert c % LANE == 0 and c2 % LANE == 0, (c, c2)
    s = stride
    ho = (h + 2 - 3) // s + 1
    wo = (w + 2 - 3) // s + 1
    hp = _round_up(h + 2, s)
    wp = _round_up(w + 2, s)
    xpad = jnp.pad(x_nhwc, ((0, 0), (1, hp - h - 1), (1, wp - w - 1), (0, 0)))
    hq, wq = hp // s, wp // s
    lq = (hq + 1) * wq          # flattened rows per phase (+1 row of zero slack)
    mo = ho * wq                # output rows per image at padded width wq

    # phases[q = ph*s + pw][a, b] = xpad[s*a + ph, s*b + pw]; flatten (a, b) -> rows
    phases = []
    for ph in range(s):
        for pw in range(s):
            p = xpad[:, ph::s, pw::s, :].reshape(n, hq * wq, c)
            phases.append(jnp.pad(p, ((0, 0), (0, lq - hq * wq), (0, 0))))
    xph = jnp.stack(phases, axis=1)                       # (N, s*s, Lq, C)

    # tap (kh, kw) -> phase (kh % s, kw % s), row offset (kh//s)*wq + kw//s
    taps = tuple(((kh % s) * s + (kw % s), (kh // s) * wq + (kw // s))
                 for kh in range(3) for kw in range(3))

    bias2 = bias.astype(jnp.float32).reshape(1, c2)
    cost = pl.CostEstimate(
        flops=2 * n * mo * 9 * c * c2, transcendentals=0,
        bytes_accessed=(int(xph.size) + int(w9.size) + n * mo * c2) * 2 + c2 * 4)

    kernel = functools.partial(_conv3x3_kernel, taps=taps, mo=mo, relu=relu)
    out = pl.pallas_call(
        kernel,
        out_shape=jax.ShapeDtypeStruct((n, mo, c2), COMPUTE_DTYPE),
        grid=(n,),
        in_specs=[
            pl.BlockSpec((1, s * s, lq, c), lambda i: (i, 0, 0, 0)),
            pl.BlockSpec((9, c, c2), lambda i: (0, 0, 0)),
            pl.BlockSpec((1, c2), lambda i: (0, 0)),
        ],
        out_specs=pl.BlockSpec((1, mo, c2), lambda i: (i, 0, 0)),
        scratch_shapes=[pltpu.VMEM((mo, c2), jnp.float32)],
        compiler_params=pltpu.CompilerParams(
            dimension_semantics=("parallel",),
            vmem_limit_bytes=VMEM_LIMIT_BYTES),
        cost_estimate=cost,
    )(xph, w9, bias2)

    # drop the (discarded) horizontal-pad output columns
    return out.reshape(n, ho, wq, c2)[:, :, :wo, :]


# ------------------------------- JAX glue ----------------------------------- #

def bn_fold(gamma, beta, mean, var, eps=1e-5):
    scale = gamma / jnp.sqrt(var + eps)
    return scale, beta - mean * scale


def init_params(key, in_channels, out_channels, base_width=64):
    """Deterministic synthetic parameters matching BottleNeck.__init__ shapes."""
    w = int(out_channels * (base_width / 64.0))
    cout = out_channels * 4  # expansion = 4
    ks = jax.random.split(key, 8)

    def conv_w(k, cin, co, kk=1):
        # stored as (kk*kk*cin, co), flattened in (kh, kw, cin) order
        return 0.2 * jax.random.normal(k, (kk * kk * cin, co), jnp.float32)

    def bn(k, c):
        k1, k2, k3, k4 = jax.random.split(k, 4)
        gamma = 1.0 + 0.1 * jax.random.normal(k1, (c,), jnp.float32)
        beta = 0.1 * jax.random.normal(k2, (c,), jnp.float32)
        mean = 0.1 * jax.random.normal(k3, (c,), jnp.float32)
        var = jax.random.uniform(k4, (c,), jnp.float32, minval=0.5, maxval=1.5)
        return gamma, beta, mean, var

    params = {
        "w1": conv_w(ks[0], in_channels, w),        # 1x1
        "bn1": bn(ks[1], w),
        "w2": conv_w(ks[2], w, w, kk=3),            # 3x3, stride
        "bn2": bn(ks[3], w),
        "w3": conv_w(ks[4], w, cout),               # 1x1
        "bn3": bn(ks[5], cout),
        "wsc": conv_w(ks[6], in_channels, cout),    # shortcut 1x1, stride
        "bnsc": bn(ks[7], cout),
    }
    return params, w, cout


def bottleneck_forward(x_nchw, params, stride):
    x = jnp.transpose(x_nchw, (0, 2, 3, 1))               # NCHW -> NHWC
    n, h, w, cin = x.shape
    wch = params["w1"].shape[1]
    cout = params["w3"].shape[1]

    cin_p, wch_p, cout_p = (_round_up(c, LANE) for c in (cin, wch, cout))

    s1, b1 = bn_fold(*params["bn1"])
    s2, b2 = bn_fold(*params["bn2"])
    s3, b3 = bn_fold(*params["bn3"])
    ssc, bsc = bn_fold(*params["bnsc"])

    # fold BN scale into weights, pad channels to lane width, cast to bf16
    w1 = _pad2(params["w1"] * s1[None, :], cin_p, wch_p).astype(COMPUTE_DTYPE)
    w3 = _pad2(params["w3"] * s3[None, :], wch_p, cout_p).astype(COMPUTE_DTYPE)
    wsc = _pad2(params["wsc"] * ssc[None, :], cin_p, cout_p).astype(COMPUTE_DTYPE)
    w2 = params["w2"].reshape(3, 3, wch, wch) * s2[None, None, None, :]
    w2 = jnp.pad(w2, ((0, 0), (0, 0), (0, wch_p - wch), (0, wch_p - wch)))
    w2 = w2.reshape(9, wch_p, wch_p).astype(COMPUTE_DTYPE)
    b1p, b2p = _pad_last(b1, wch_p), _pad_last(b2, wch_p)
    b3p, bscp = _pad_last(b3, cout_p), _pad_last(bsc, cout_p)

    xp = jnp.pad(x, ((0, 0), (0, 0), (0, 0), (0, cin_p - cin))).astype(COMPUTE_DTYPE)

    # conv1 1x1 + BN + ReLU
    y1 = matmul_bias_act(xp.reshape(n * h * w, cin_p), w1, b1p, relu=True)
    y1 = y1.reshape(n, h, w, wch_p)

    # conv2 3x3 (stride, padding=1) + BN + ReLU — taps accumulated in-kernel
    y2 = conv3x3_bn_act(y1, w2, b2p, stride, relu=True)
    ho, wo = y2.shape[1], y2.shape[2]
    y2 = y2.reshape(n * ho * wo, wch_p)

    # shortcut branch
    if stride != 1 or cin != cout:
        xs = xp[:, ::stride, ::stride, :].reshape(n * ho * wo, cin_p)
        sc = matmul_bias_act(xs, wsc, bscp, relu=False)
    else:
        sc = xp.reshape(n * h * w, cin_p)

    # conv3 1x1 + BN + residual add + ReLU, fused in one kernel
    y3 = matmul_bias_act(y2, w3, b3p, residual=sc, relu=True)
    y3 = y3.reshape(n, ho, wo, cout_p)[:, :, :, :cout]
    return jnp.transpose(y3, (0, 3, 1, 2)).astype(jnp.float32)


# --------------------------- pure-JAX reference ------------------------------ #

def reference_forward(x_nchw, params, stride):
    def conv1x1(x, wmat, st=1):
        wk = wmat.reshape(1, 1, wmat.shape[0], wmat.shape[1])
        return jax.lax.conv_general_dilated(
            x, wk, (st, st), "VALID",
            dimension_numbers=("NHWC", "HWIO", "NHWC"))

    def conv3x3(x, wmat, st):
        cin = wmat.shape[0] // 9
        wk = wmat.reshape(3, 3, cin, wmat.shape[1])
        return jax.lax.conv_general_dilated(
            x, wk, (st, st), ((1, 1), (1, 1)),
            dimension_numbers=("NHWC", "HWIO", "NHWC"))

    def bn(x, p):
        s, b = bn_fold(*p)
        return x * s + b

    x = jnp.transpose(x_nchw, (0, 2, 3, 1))
    y = jax.nn.relu(bn(conv1x1(x, params["w1"]), params["bn1"]))
    y = jax.nn.relu(bn(conv3x3(y, params["w2"], stride), params["bn2"]))
    y = bn(conv1x1(y, params["w3"]), params["bn3"])
    sc = bn(conv1x1(x, params["wsc"], stride), params["bnsc"])
    out = jax.nn.relu(y + sc)
    return jnp.transpose(out, (0, 3, 1, 2))


# ----------------------------------- main ------------------------------------ #

if __name__ == "__main__":
    key = jax.random.PRNGKey(0)
    kx, kp = jax.random.split(key)

    N, Cin, H, W = 2, 16, 8, 8
    out_channels, stride = 8, 2          # w = 8, output channels = 8*4 = 32

    x = jax.random.normal(kx, (N, Cin, H, W), jnp.float32)
    params, wch, cout = init_params(kp, Cin, out_channels)

    fwd = jax.jit(functools.partial(bottleneck_forward, stride=stride))
    out = jax.block_until_ready(fwd(x, params))

    assert out.shape == (N, cout, H // stride, W // stride), out.shape
    ref = reference_forward(x, params, stride)
    # tolerance accounts for bf16 activations/weights (accumulation is f32)
    max_err = float(jnp.max(jnp.abs(out - ref)))
    assert jnp.allclose(out, ref, rtol=5e-2, atol=1e-1), max_err

    print("KERNEL_OK")
</pallas_src>

<mosaic_0001>
module attributes {stable_mosaic.version = 11 : i64} {
  func.func @_mm_bias_kernel(%arg0: i32, %arg1: memref<128x128xbf16, #tpu.memory_space<vmem>>, %arg2: memref<128x128xbf16, #tpu.memory_space<vmem>>, %arg3: memref<1x128xf32, #tpu.memory_space<vmem>>, %arg4: memref<128x128xbf16, #tpu.memory_space<vmem>>) attributes {dimension_semantics = [#tpu.dimension_semantics<parallel>], iteration_bounds = array<i64: 1>, scalar_prefetch = 0 : i64, scratch_operands = 0 : i64, tpu.core_type = #tpu.core_type<tc>, window_params = [{transform_indices = @transform_0, window_bounds = array<i64: 128, 128>}, {pipeline_mode = #tpu.pipeline_mode<synchronous>, transform_indices = @transform_1, window_bounds = array<i64: 128, 128>}, {pipeline_mode = #tpu.pipeline_mode<synchronous>, transform_indices = @transform_2, window_bounds = array<i64: 1, 128>}, {transform_indices = @transform_3, window_bounds = array<i64: 128, 128>}]} {
    %c0 = arith.constant 0 : index
    %c0_0 = arith.constant 0 : index
    %0 = vector.load %arg1[%c0, %c0_0] : memref<128x128xbf16, #tpu.memory_space<vmem>>, vector<128x128xbf16>
    %c0_1 = arith.constant 0 : index
    %c0_2 = arith.constant 0 : index
    %1 = vector.load %arg2[%c0_1, %c0_2] : memref<128x128xbf16, #tpu.memory_space<vmem>>, vector<128x128xbf16>
    %cst = arith.constant dense<0.000000e+00> : vector<128x128xf32>
    %2 = tpu.matmul %0, %1, %cst {dimension_numbers = #tpu.dot_dimension_numbers<[1], [0], [0], [1], [0, 0, 1, 1], [], []>} : vector<128x128xbf16>, vector<128x128xbf16>, vector<128x128xf32> -> vector<128x128xf32>
    %c0_3 = arith.constant 0 : index
    %c0_4 = arith.constant 0 : index
    %3 = vector.load %arg3[%c0_3, %c0_4] : memref<1x128xf32, #tpu.memory_space<vmem>>, vector<1x128xf32>
    %4 = vector.broadcast %3 : vector<1x128xf32> to vector<128x128xf32>
    %5 = arith.addf %2, %4 : vector<128x128xf32>
    %cst_5 = arith.constant 0.000000e+00 : f32
    %6 = vector.broadcast %cst_5 : f32 to vector<128x128xf32>
    %7 = arith.maximumf %5, %6 : vector<128x128xf32>
    %8 = arith.truncf %7 : vector<128x128xf32> to vector<128x128xbf16>
    %c0_6 = arith.constant 0 : index
    %c0_7 = arith.constant 0 : index
    %9 = vector.load %arg4[%c0_6, %c0_7] : memref<128x128xbf16, #tpu.memory_space<vmem>>, vector<128x128xbf16>
    tpu.vector_store %arg4[%c0_6, %c0_7], %8 {strides = array<i32>} : memref<128x128xbf16, #tpu.memory_space<vmem>>, vector<128x128xbf16>,
    return
  }
  func.func @transform_0(%arg0: i32) -> (i32, i32) {
    %c0_i32 = arith.constant 0 : i32
    %c0_i32_0 = arith.constant 0 : i32
    return %arg0, %c0_i32 : i32, i32
  }
  func.func @transform_1(%arg0: i32) -> (i32, i32) {
    %c0_i32 = arith.constant 0 : i32
    %c0_i32_0 = arith.constant 0 : i32
    %c0_i32_1 = arith.constant 0 : i32
    return %c0_i32, %c0_i32_0 : i32, i32
  }
  func.func @transform_2(%arg0: i32) -> (i32, i32) {
    %c0_i32 = arith.constant 0 : i32
    %c0_i32_0 = arith.constant 0 : i32
    %c0_i32_1 = arith.constant 0 : i32
    return %c0_i32, %c0_i32_0 : i32, i32
  }
  func.func @transform_3(%arg0: i32) -> (i32, i32) {
    %c0_i32 = arith.constant 0 : i32
    %c0_i32_0 = arith.constant 0 : i32
    return %arg0, %c0_i32 : i32, i32
  }
}

module attributes {stable_mosaic.version = 11 : i64} {
  func.func @_conv3x3_kernel(%arg0: i32, %arg1: memref<1x4x30x128xbf16, #tpu.memory_space<vmem>>, %arg2: memref<9x128x128xbf16, #tpu.memory_space<vmem>>, %arg3: memref<1x128xf32, #tpu.memory_space<vmem>>, %arg4: memref<1x20x128xbf16, #tpu.memory_space<vmem>>, %arg5: memref<20x128xf32, #tpu.memory_space<vmem>>) attributes {dimension_semantics = [#tpu.dimension_semantics<parallel>], iteration_bounds = array<i64: 2>, scalar_prefetch = 0 : i64, scratch_operands = 1 : i64, tpu.core_type = #tpu.core_type<tc>, window_params = [{transform_indices = @transform_0, window_bounds = array<i64: 1, 4, 30, 128>}, {pipeline_mode = #tpu.pipeline_mode<synchronous>, transform_indices = @transform_1, window_bounds = array<i64: 9, 128, 128>}, {pipeline_mode = #tpu.pipeline_mode<synchronous>, transform_indices = @transform_2, window_bounds = array<i64: 1, 128>}, {transform_indices = @transform_3, window_bounds = array<i64: 1, 20, 128>}]} {
    %c0 = arith.constant 0 : index
    %c0_0 = arith.constant 0 : index
    %c0_1 = arith.constant 0 : index
    %c0_2 = arith.constant 0 : index
    %0 = vector.load %arg1[%c0, %c0_0, %c0_1, %c0_2] : memref<1x4x30x128xbf16, #tpu.memory_space<vmem>>, vector<1x1x20x128xbf16>
    %1 = vector.shape_cast %0 : vector<1x1x20x128xbf16> to vector<20x128xbf16>
    %c0_3 = arith.constant 0 : index
    %c0_4 = arith.constant 0 : index
    %c0_5 = arith.constant 0 : index
    %2 = vector.load %arg2[%c0_3, %c0_4, %c0_5] : memref<9x128x128xbf16, #tpu.memory_space<vmem>>, vector<1x128x128xbf16>
    %3 = vector.shape_cast %2 : vector<1x128x128xbf16> to vector<128x128xbf16>
    %cst = arith.constant dense<0.000000e+00> : vector<20x128xf32>
    %4 = tpu.matmul %1, %3, %cst {dimension_numbers = #tpu.dot_dimension_numbers<[1], [0], [0], [1], [0, 0, 1, 1], [], []>} : vector<20x128xbf16>, vector<128x128xbf16>, vector<20x128xf32> -> vector<20x128xf32>
    %c0_6 = arith.constant 0 : index
    %c0_7 = arith.constant 0 : index
    %5 = vector.load %arg5[%c0_6, %c0_7] : memref<20x128xf32, #tpu.memory_space<vmem>>, vector<20x128xf32>
    tpu.vector_store %arg5[%c0_6, %c0_7], %4 {strides = array<i32>} : memref<20x128xf32, #tpu.memory_space<vmem>>, vector<20x128xf32>,
    %c0_8 = arith.constant 0 : index
    %c1 = arith.constant 1 : index
    %c0_9 = arith.constant 0 : index
    %c0_10 = arith.constant 0 : index
    %6 = vector.load %arg1[%c0_8, %c1, %c0_9, %c0_10] : memref<1x4x30x128xbf16, #tpu.memory_space<vmem>>, vector<1x1x20x128xbf16>
    %7 = vector.shape_cast %6 : vector<1x1x20x128xbf16> to vector<20x128xbf16>
    %c1_11 = arith.constant 1 : index
    %c0_12 = arith.constant 0 : index
    %c0_13 = arith.constant 0 : index
    %8 = vector.load %arg2[%c1_11, %c0_12, %c0_13] : memref<9x128x128xbf16, #tpu.memory_space<vmem>>, vector<1x128x128xbf16>
    %9 = vector.shape_cast %8 : vector<1x128x128xbf16> to vector<128x128xbf16>
    %cst_14 = arith.constant dense<0.000000e+00> : vector<20x128xf32>
    %10 = tpu.matmul %7, %9, %cst_14 {dimension_numbers = #tpu.dot_dimension_numbers<[1], [0], [0], [1], [0, 0, 1, 1], [], []>} : vector<20x128xbf16>, vector<128x128xbf16>, vector<20x128xf32> -> vector<20x128xf32>
    %c0_15 = arith.constant 0 : index
    %c0_16 = arith.constant 0 : index
    %11 = vector.load %arg5[%c0_15, %c0_16] : memref<20x128xf32, #tpu.memory_space<vmem>>, vector<20x128xf32>
    %12 = arith.addf %11, %10 : vector<20x128xf32>
    %c0_17 = arith.constant 0 : index
    %c0_18 = arith.constant 0 : index
    %13 = vector.load %arg5[%c0_17, %c0_18] : memref<20x128xf32, #tpu.memory_space<vmem>>, vector<20x128xf32>
    tpu.vector_store %arg5[%c0_17, %c0_18], %12 {strides = array<i32>} : memref<20x128xf32, #tpu.memory_space<vmem>>, vector<20x128xf32>,
    %c0_19 = arith.constant 0 : index
    %c0_20 = arith.constant 0 : index
    %c1_21 = arith.constant 1 : index
    %c0_22 = arith.constant 0 : index
    %14 = vector.load %arg1[%c0_19, %c0_20, %c1_21, %c0_22] : memref<1x4x30x128xbf16, #tpu.memory_space<vmem>>, vector<1x1x20x128xbf16>
    %15 = vector.shape_cast %14 : vector<1x1x20x128xbf16> to vector<20x128xbf16>
    %c2 = arith.constant 2 : index
    %c0_23 = arith.constant 0 : index
    %c0_24 = arith.constant 0 : index
    %16 = vector.load %arg2[%c2, %c0_23, %c0_24] : memref<9x128x128xbf16, #tpu.memory_space<vmem>>, vector<1x128x128xbf16>
    %17 = vector.shape_cast %16 : vector<1x128x128xbf16> to vector<128x128xbf16>
    %cst_25 = arith.constant dense<0.000000e+00> : vector<20x128xf32>
    %18 = tpu.matmul %15, %17, %cst_25 {dimension_numbers = #tpu.dot_dimension_numbers<[1], [0], [0], [1], [0, 0, 1, 1], [], []>} : vector<20x128xbf16>, vector<128x128xbf16>, vector<20x128xf32> -> vector<20x128xf32>
    %c0_26 = arith.constant 0 : index
    %c0_27 = arith.constant 0 : index
    %19 = vector.load %arg5[%c0_26, %c0_27] : memref<20x128xf32, #tpu.memory_space<vmem>>, vector<20x128xf32>
    %20 = arith.addf %19, %18 : vector<20x128xf32>
    %c0_28 = arith.constant 0 : index
    %c0_29 = arith.constant 0 : index
    %21 = vector.load %arg5[%c0_28, %c0_29] : memref<20x128xf32, #tpu.memory_space<vmem>>, vector<20x128xf32>
    tpu.vector_store %arg5[%c0_28, %c0_29], %20 {strides = array<i32>} : memref<20x128xf32, #tpu.memory_space<vmem>>, vector<20x128xf32>,
    %c0_30 = arith.constant 0 : index
    %c2_31 = arith.constant 2 : index
    %c0_32 = arith.constant 0 : index
    %c0_33 = arith.constant 0 : index
    %22 = vector.load %arg1[%c0_30, %c2_31, %c0_32, %c0_33] : memref<1x4x30x128xbf16, #tpu.memory_space<vmem>>, vector<1x1x20x128xbf16>
    %23 = vector.shape_cast %22 : vector<1x1x20x128xbf16> to vector<20x128xbf16>
    %c3 = arith.constant 3 : index
    %c0_34 = arith.constant 0 : index
    %c0_35 = arith.constant 0 : index
    %24 = vector.load %arg2[%c3, %c0_34, %c0_35] : memref<9x128x128xbf16, #tpu.memory_space<vmem>>, vector<1x128x128xbf16>
    %25 = vector.shape_cast %24 : vector<1x128x128xbf16> to vector<128x128xbf16>
    %cst_36 = arith.constant dense<0.000000e+00> : vector<20x128xf32>
    %26 = tpu.matmul %23, %25, %cst_36 {dimension_numbers = #tpu.dot_dimension_numbers<[1], [0], [0], [1], [0, 0, 1, 1], [], []>} : vector<20x128xbf16>, vector<128x128xbf16>, vector<20x128xf32> -> vector<20x128xf32>
    %c0_37 = arith.constant 0 : index
    %c0_38 = arith.constant 0 : index
    %27 = vector.load %arg5[%c0_37, %c0_38] : memref<20x128xf32, #tpu.memory_space<vmem>>, vector<20x128xf32>
    %28 = arith.addf %27, %26 : vector<20x128xf32>
    %c0_39 = arith.constant 0 : index
    %c0_40 = arith.constant 0 : index
    %29 = vector.load %arg5[%c0_39, %c0_40] : memref<20x128xf32, #tpu.memory_space<vmem>>, vector<20x128xf32>
    tpu.vector_store %arg5[%c0_39, %c0_40], %28 {strides = array<i32>} : memref<20x128xf32, #tpu.memory_space<vmem>>, vector<20x128xf32>,
    %c0_41 = arith.constant 0 : index
    %c3_42 = arith.constant 3 : index
    %c0_43 = arith.constant 0 : index
    %c0_44 = arith.constant 0 : index
    %30 = vector.load %arg1[%c0_41, %c3_42, %c0_43, %c0_44] : memref<1x4x30x128xbf16, #tpu.memory_space<vmem>>, vector<1x1x20x128xbf16>
    %31 = vector.shape_cast %30 : vector<1x1x20x128xbf16> to vector<20x128xbf16>
    %c4 = arith.constant 4 : index
    %c0_45 = arith.constant 0 : index
    %c0_46 = arith.constant 0 : index
    %32 = vector.load %arg2[%c4, %c0_45, %c0_46] : memref<9x128x128xbf16, #tpu.memory_space<vmem>>, vector<1x128x128xbf16>
    %33 = vector.shape_cast %32 : vector<1x128x128xbf16> to vector<128x128xbf16>
    %cst_47 = arith.constant dense<0.000000e+00> : vector<20x128xf32>
    %34 = tpu.matmul %31, %33, %cst_47 {dimension_numbers = #tpu.dot_dimension_numbers<[1], [0], [0], [1], [0, 0, 1, 1], [], []>} : vector<20x128xbf16>, vector<128x128xbf16>, vector<20x128xf32> -> vector<20x128xf32>
    %c0_48 = arith.constant 0 : index
    %c0_49 = arith.constant 0 : index
    %35 = vector.load %arg5[%c0_48, %c0_49] : memref<20x128xf32, #tpu.memory_space<vmem>>, vector<20x128xf32>
    %36 = arith.addf %35, %34 : vector<20x128xf32>
    %c0_50 = arith.constant 0 : index
    %c0_51 = arith.constant 0 : index
    %37 = vector.load %arg5[%c0_50, %c0_51] : memref<20x128xf32, #tpu.memory_space<vmem>>, vector<20x128xf32>
    tpu.vector_store %arg5[%c0_50, %c0_51], %36 {strides = array<i32>} : memref<20x128xf32, #tpu.memory_space<vmem>>, vector<20x128xf32>,
    %c0_52 = arith.constant 0 : index
    %c2_53 = arith.constant 2 : index
    %c1_54 = arith.constant 1 : index
    %c0_55 = arith.constant 0 : index
    %38 = vector.load %arg1[%c0_52, %c2_53, %c1_54, %c0_55] : memref<1x4x30x128xbf16, #tpu.memory_space<vmem>>, vector<1x1x20x128xbf16>
    %39 = vector.shape_cast %38 : vector<1x1x20x128xbf16> to vector<20x128xbf16>
    %c5 = arith.constant 5 : index
    %c0_56 = arith.constant 0 : index
    %c0_57 = arith.constant 0 : index
    %40 = vector.load %arg2[%c5, %c0_56, %c0_57] : memref<9x128x128xbf16, #tpu.memory_space<vmem>>, vector<1x128x128xbf16>
    %41 = vector.shape_cast %40 : vector<1x128x128xbf16> to vector<128x128xbf16>
    %cst_58 = arith.constant dense<0.000000e+00> : vector<20x128xf32>
    %42 = tpu.matmul %39, %41, %cst_58 {dimension_numbers = #tpu.dot_dimension_numbers<[1], [0], [0], [1], [0, 0, 1, 1], [], []>} : vector<20x128xbf16>, vector<128x128xbf16>, vector<20x128xf32> -> vector<20x128xf32>
    %c0_59 = arith.constant 0 : index
    %c0_60 = arith.constant 0 : index
    %43 = vector.load %arg5[%c0_59, %c0_60] : memref<20x128xf32, #tpu.memory_space<vmem>>, vector<20x128xf32>
    %44 = arith.addf %43, %42 : vector<20x128xf32>
    %c0_61 = arith.constant 0 : index
    %c0_62 = arith.constant 0 : index
    %45 = vector.load %arg5[%c0_61, %c0_62] : memref<20x128xf32, #tpu.memory_space<vmem>>, vector<20x128xf32>
    tpu.vector_store %arg5[%c0_61, %c0_62], %44 {strides = array<i32>} : memref<20x128xf32, #tpu.memory_space<vmem>>, vector<20x128xf32>,
    %c0_63 = arith.constant 0 : index
    %c0_64 = arith.constant 0 : index
    %c5_65 = arith.constant 5 : index
    %c0_66 = arith.constant 0 : index
    %46 = vector.load %arg1[%c0_63, %c0_64, %c5_65, %c0_66] : memref<1x4x30x128xbf16, #tpu.memory_space<vmem>>, vector<1x1x20x128xbf16>
    %47 = vector.shape_cast %46 : vector<1x1x20x128xbf16> to vector<20x128xbf16>
    %c6 = arith.constant 6 : index
    %c0_67 = arith.constant 0 : index
    %c0_68 = arith.constant 0 : index
    %48 = vector.load %arg2[%c6, %c0_67, %c0_68] : memref<9x128x128xbf16, #tpu.memory_space<vmem>>, vector<1x128x128xbf16>
    %49 = vector.shape_cast %48 : vector<1x128x128xbf16> to vector<128x128xbf16>
    %cst_69 = arith.constant dense<0.000000e+00> : vector<20x128xf32>
    %50 = tpu.matmul %47, %49, %cst_69 {dimension_numbers = #tpu.dot_dimension_numbers<[1], [0], [0], [1], [0, 0, 1, 1], [], []>} : vector<20x128xbf16>, vector<128x128xbf16>, vector<20x128xf32> -> vector<20x128xf32>
    %c0_70 = arith.constant 0 : index
    %c0_71 = arith.constant 0 : index
    %51 = vector.load %arg5[%c0_70, %c0_71] : memref<20x128xf32, #tpu.memory_space<vmem>>, vector<20x128xf32>
    %52 = arith.addf %51, %50 : vector<20x128xf32>
    %c0_72 = arith.constant 0 : index
    %c0_73 = arith.constant 0 : index
    %53 = vector.load %arg5[%c0_72, %c0_73] : memref<20x128xf32, #tpu.memory_space<vmem>>, vector<20x128xf32>
    tpu.vector_store %arg5[%c0_72, %c0_73], %52 {strides = array<i32>} : memref<20x128xf32, #tpu.memory_space<vmem>>, vector<20x128xf32>,
    %c0_74 = arith.constant 0 : index
    %c1_75 = arith.constant 1 : index
    %c5_76 = arith.constant 5 : index
    %c0_77 = arith.constant 0 : index
    %54 = vector.load %arg1[%c0_74, %c1_75, %c5_76, %c0_77] : memref<1x4x30x128xbf16, #tpu.memory_space<vmem>>, vector<1x1x20x128xbf16>
    %55 = vector.shape_cast %54 : vector<1x1x20x128xbf16> to vector<20x128xbf16>
    %c7 = arith.constant 7 : index
    %c0_78 = arith.constant 0 : index
    %c0_79 = arith.constant 0 : index
    %56 = vector.load %arg2[%c7, %c0_78, %c0_79] : memref<9x128x128xbf16, #tpu.memory_space<vmem>>, vector<1x128x128xbf16>
    %57 = vector.shape_cast %56 : vector<1x128x128xbf16> to vector<128x128xbf16>
    %cst_80 = arith.constant dense<0.000000e+00> : vector<20x128xf32>
    %58 = tpu.matmul %55, %57, %cst_80 {dimension_numbers = #tpu.dot_dimension_numbers<[1], [0], [0], [1], [0, 0, 1, 1], [], []>} : vector<20x128xbf16>, vector<128x128xbf16>, vector<20x128xf32> -> vector<20x128xf32>
    %c0_81 = arith.constant 0 : index
    %c0_82 = arith.constant 0 : index
    %59 = vector.load %arg5[%c0_81, %c0_82] : memref<20x128xf32, #tpu.memory_space<vmem>>, vector<20x128xf32>
    %60 = arith.addf %59, %58 : vector<20x128xf32>
    %c0_83 = arith.constant 0 : index
    %c0_84 = arith.constant 0 : index
    %61 = vector.load %arg5[%c0_83, %c0_84] : memref<20x128xf32, #tpu.memory_space<vmem>>, vector<20x128xf32>
    tpu.vector_store %arg5[%c0_83, %c0_84], %60 {strides = array<i32>} : memref<20x128xf32, #tpu.memory_space<vmem>>, vector<20x128xf32>,
    %c0_85 = arith.constant 0 : index
    %c0_86 = arith.constant 0 : index
    %c6_87 = arith.constant 6 : index
    %c0_88 = arith.constant 0 : index
    %62 = vector.load %arg1[%c0_85, %c0_86, %c6_87, %c0_88] : memref<1x4x30x128xbf16, #tpu.memory_space<vmem>>, vector<1x1x20x128xbf16>
    %63 = vector.shape_cast %62 : vector<1x1x20x128xbf16> to vector<20x128xbf16>
    %c8 = arith.constant 8 : index
    %c0_89 = arith.constant 0 : index
    %c0_90 = arith.constant 0 : index
    %64 = vector.load %arg2[%c8, %c0_89, %c0_90] : memref<9x128x128xbf16, #tpu.memory_space<vmem>>, vector<1x128x128xbf16>
    %65 = vector.shape_cast %64 : vector<1x128x128xbf16> to vector<128x128xbf16>
    %cst_91 = arith.constant dense<0.000000e+00> : vector<20x128xf32>
    %66 = tpu.matmul %63, %65, %cst_91 {dimension_numbers = #tpu.dot_dimension_numbers<[1], [0], [0], [1], [0, 0, 1, 1], [], []>} : vector<20x128xbf16>, vector<128x128xbf16>, vector<20x128xf32> -> vector<20x128xf32>
    %c0_92 = arith.constant 0 : index
    %c0_93 = arith.constant 0 : index
    %67 = vector.load %arg5[%c0_92, %c0_93] : memref<20x128xf32, #tpu.memory_space<vmem>>, vector<20x128xf32>
    %68 = arith.addf %67, %66 : vector<20x128xf32>
    %c0_94 = arith.constant 0 : index
    %c0_95 = arith.constant 0 : index
    %69 = vector.load %arg5[%c0_94, %c0_95] : memref<20x128xf32, #tpu.memory_space<vmem>>, vector<20x128xf32>
    tpu.vector_store %arg5[%c0_94, %c0_95], %68 {strides = array<i32>} : memref<20x128xf32, #tpu.memory_space<vmem>>, vector<20x128xf32>,
    %c0_96 = arith.constant 0 : index
    %c0_97 = arith.constant 0 : index
    %70 = vector.load %arg5[%c0_96, %c0_97] : memref<20x128xf32, #tpu.memory_space<vmem>>, vector<20x128xf32>
    %c0_98 = arith.constant 0 : index
    %c0_99 = arith.constant 0 : index
    %71 = vector.load %arg3[%c0_98, %c0_99] : memref<1x128xf32, #tpu.memory_space<vmem>>, vector<1x128xf32>
    %72 = vector.broadcast %71 : vector<1x128xf32> to vector<20x128xf32>
    %73 = arith.addf %70, %72 : vector<20x128xf32>
    %cst_100 = arith.constant 0.000000e+00 : f32
    %74 = vector.broadcast %cst_100 : f32 to vector<20x128xf32>
    %75 = arith.maximumf %73, %74 : vector<20x128xf32>
    %76 = arith.truncf %75 : vector<20x128xf32> to vector<20x128xbf16>
    %c0_101 = arith.constant 0 : index
    %c0_102 = arith.constant 0 : index
    %c0_103 = arith.constant 0 : index
    %77 = vector.load %arg4[%c0_101, %c0_102, %c0_103] : memref<1x20x128xbf16, #tpu.memory_space<vmem>>, vector<1x20x128xbf16>
    %78 = vector.shape_cast %77 : vector<1x20x128xbf16> to vector<20x128xbf16>
    %79 = vector.shape_cast %76 : vector<20x128xbf16> to vector<1x20x128xbf16>
    tpu.vector_store %arg4[%c0_101, %c0_102, %c0_103], %79 {strides = array<i32>} : memref<1x20x128xbf16, #tpu.memory_space<vmem>>, vector<1x20x128xbf16>,
    return
  }
  func.func @transform_0(%arg0: i32) -> (i32, i32, i32, i32) {
    %c0_i32 = arith.constant 0 : i32
    %c0_i32_0 = arith.constant 0 : i32
    %c0_i32_1 = arith.constant 0 : i32
    %c0_i32_2 = arith.constant 0 : i32
    return %arg0, %c0_i32, %c0_i32_0, %c0_i32_1 : i32, i32, i32, i32
  }
  func.func @transform_1(%arg0: i32) -> (i32, i32, i32) {
    %c0_i32 = arith.constant 0 : i32
    %c0_i32_0 = arith.constant 0 : i32
    %c0_i32_1 = arith.constant 0 : i32
    %c0_i32_2 = arith.constant 0 : i32
    return %c0_i32, %c0_i32_0, %c0_i32_1 : i32, i32, i32
  }
  func.func @transform_2(%arg0: i32) -> (i32, i32) {
    %c0_i32 = arith.constant 0 : i32
    %c0_i32_0 = arith.constant 0 : i32
    %c0_i32_1 = arith.constant 0 : i32
    return %c0_i32, %c0_i32_0 : i32, i32
  }
  func.func @transform_3(%arg0: i32) -> (i32, i32, i32) {
    %c0_i32 = arith.constant 0 : i32
    %c0_i32_0 = arith.constant 0 : i32
    %c0_i32_1 = arith.constant 0 : i32
    return %arg0, %c0_i32, %c0_i32_0 : i32, i32, i32
  }
}

module attributes {stable_mosaic.version = 11 : i64} {
  func.func @_mm_bias_kernel(%arg0: i32, %arg1: memref<32x128xbf16, #tpu.memory_space<vmem>>, %arg2: memref<128x128xbf16, #tpu.memory_space<vmem>>, %arg3: memref<1x128xf32, #tpu.memory_space<vmem>>, %arg4: memref<32x128xbf16, #tpu.memory_space<vmem>>) attributes {dimension_semantics = [#tpu.dimension_semantics<parallel>], iteration_bounds = array<i64: 1>, scalar_prefetch = 0 : i64, scratch_operands = 0 : i64, tpu.core_type = #tpu.core_type<tc>, window_params = [{transform_indices = @transform_0, window_bounds = array<i64: 32, 128>}, {pipeline_mode = #tpu.pipeline_mode<synchronous>, transform_indices = @transform_1, window_bounds = array<i64: 128, 128>}, {pipeline_mode = #tpu.pipeline_mode<synchronous>, transform_indices = @transform_2, window_bounds = array<i64: 1, 128>}, {transform_indices = @transform_3, window_bounds = array<i64: 32, 128>}]} {
    %c0 = arith.constant 0 : index
    %c0_0 = arith.constant 0 : index
    %0 = vector.load %arg1[%c0, %c0_0] : memref<32x128xbf16, #tpu.memory_space<vmem>>, vector<32x128xbf16>
    %c0_1 = arith.constant 0 : index
    %c0_2 = arith.constant 0 : index
    %1 = vector.load %arg2[%c0_1, %c0_2] : memref<128x128xbf16, #tpu.memory_space<vmem>>, vector<128x128xbf16>
    %cst = arith.constant dense<0.000000e+00> : vector<32x128xf32>
    %2 = tpu.matmul %0, %1, %cst {dimension_numbers = #tpu.dot_dimension_numbers<[1], [0], [0], [1], [0, 0, 1, 1], [], []>} : vector<32x128xbf16>, vector<128x128xbf16>, vector<32x128xf32> -> vector<32x128xf32>
    %c0_3 = arith.constant 0 : index
    %c0_4 = arith.constant 0 : index
    %3 = vector.load %arg3[%c0_3, %c0_4] : memref<1x128xf32, #tpu.memory_space<vmem>>, vector<1x128xf32>
    %4 = vector.broadcast %3 : vector<1x128xf32> to vector<32x128xf32>
    %5 = arith.addf %2, %4 : vector<32x128xf32>
    %6 = arith.truncf %5 : vector<32x128xf32> to vector<32x128xbf16>
    %c0_5 = arith.constant 0 : index
    %c0_6 = arith.constant 0 : index
    %7 = vector.load %arg4[%c0_5, %c0_6] : memref<32x128xbf16, #tpu.memory_space<vmem>>, vector<32x128xbf16>
    tpu.vector_store %arg4[%c0_5, %c0_6], %6 {strides = array<i32>} : memref<32x128xbf16, #tpu.memory_space<vmem>>, vector<32x128xbf16>,
    return
  }
  func.func @transform_0(%arg0: i32) -> (i32, i32) {
    %c0_i32 = arith.constant 0 : i32
    %c0_i32_0 = arith.constant 0 : i32
    return %arg0, %c0_i32 : i32, i32
  }
  func.func @transform_1(%arg0: i32) -> (i32, i32) {
    %c0_i32 = arith.constant 0 : i32
    %c0_i32_0 = arith.constant 0 : i32
    %c0_i32_1 = arith.constant 0 : i32
    return %c0_i32, %c0_i32_0 : i32, i32
  }
  func.func @transform_2(%arg0: i32) -> (i32, i32) {
    %c0_i32 = arith.constant 0 : i32
    %c0_i32_0 = arith.constant 0 : i32
    %c0_i32_1 = arith.constant 0 : i32
    return %c0_i32, %c0_i32_0 : i32, i32
  }
  func.func @transform_3(%arg0: i32) -> (i32, i32) {
    %c0_i32 = arith.constant 0 : i32
    %c0_i32_0 = arith.constant 0 : i32
    return %arg0, %c0_i32 : i32, i32
  }
}

module attributes {stable_mosaic.version = 11 : i64} {
  func.func @_mm_bias_kernel(%arg0: i32, %arg1: memref<32x128xbf16, #tpu.memory_space<vmem>>, %arg2: memref<128x128xbf16, #tpu.memory_space<vmem>>, %arg3: memref<1x128xf32, #tpu.memory_space<vmem>>, %arg4: memref<32x128xbf16, #tpu.memory_space<vmem>>, %arg5: memref<32x128xbf16, #tpu.memory_space<vmem>>) attributes {dimension_semantics = [#tpu.dimension_semantics<parallel>], iteration_bounds = array<i64: 1>, scalar_prefetch = 0 : i64, scratch_operands = 0 : i64, tpu.core_type = #tpu.core_type<tc>, window_params = [{transform_indices = @transform_0, window_bounds = array<i64: 32, 128>}, {pipeline_mode = #tpu.pipeline_mode<synchronous>, transform_indices = @transform_1, window_bounds = array<i64: 128, 128>}, {pipeline_mode = #tpu.pipeline_mode<synchronous>, transform_indices = @transform_2, window_bounds = array<i64: 1, 128>}, {transform_indices = @transform_3, window_bounds = array<i64: 32, 128>}, {transform_indices = @transform_4, window_bounds = array<i64: 32, 128>}]} {
    %c0 = arith.constant 0 : index
    %c0_0 = arith.constant 0 : index
    %0 = vector.load %arg1[%c0, %c0_0] : memref<32x128xbf16, #tpu.memory_space<vmem>>, vector<32x128xbf16>
    %c0_1 = arith.constant 0 : index
    %c0_2 = arith.constant 0 : index
    %1 = vector.load %arg2[%c0_1, %c0_2] : memref<128x128xbf16, #tpu.memory_space<vmem>>, vector<128x128xbf16>
    %cst = arith.constant dense<0.000000e+00> : vector<32x128xf32>
    %2 = tpu.matmul %0, %1, %cst {dimension_numbers = #tpu.dot_dimension_numbers<[1], [0], [0], [1], [0, 0, 1, 1], [], []>} : vector<32x128xbf16>, vector<128x128xbf16>, vector<32x128xf32> -> vector<32x128xf32>
    %c0_3 = arith.constant 0 : index
    %c0_4 = arith.constant 0 : index
    %3 = vector.load %arg3[%c0_3, %c0_4] : memref<1x128xf32, #tpu.memory_space<vmem>>, vector<1x128xf32>
    %4 = vector.broadcast %3 : vector<1x128xf32> to vector<32x128xf32>
    %5 = arith.addf %2, %4 : vector<32x128xf32>
    %c0_5 = arith.constant 0 : index
    %c0_6 = arith.constant 0 : index
    %6 = vector.load %arg4[%c0_5, %c0_6] : memref<32x128xbf16, #tpu.memory_space<vmem>>, vector<32x128xbf16>
    %7 = arith.extf %6 : vector<32x128xbf16> to vector<32x128xf32>
    %8 = arith.addf %5, %7 : vector<32x128xf32>
    %cst_7 = arith.constant 0.000000e+00 : f32
    %9 = vector.broadcast %cst_7 : f32 to vector<32x128xf32>
    %10 = arith.maximumf %8, %9 : vector<32x128xf32>
    %11 = arith.truncf %10 : vector<32x128xf32> to vector<32x128xbf16>
    %c0_8 = arith.constant 0 : index
    %c0_9 = arith.constant 0 : index
    %12 = vector.load %arg5[%c0_8, %c0_9] : memref<32x128xbf16, #tpu.memory_space<vmem>>, vector<32x128xbf16>
    tpu.vector_store %arg5[%c0_8, %c0_9], %11 {strides = array<i32>} : memref<32x128xbf16, #tpu.memory_space<vmem>>, vector<32x128xbf16>,
    return
  }
  func.func @transform_0(%arg0: i32) -> (i32, i32) {
    %c0_i32 = arith.constant 0 : i32
    %c0_i32_0 = arith.constant 0 : i32
    return %arg0, %c0_i32 : i32, i32
  }
  func.func @transform_1(%arg0: i32) -> (i32, i32) {
    %c0_i32 = arith.constant 0 : i32
    %c0_i32_0 = arith.constant 0 : i32
    %c0_i32_1 = arith.constant 0 : i32
    return %c0_i32, %c0_i32_0 : i32, i32
  }
  func.func @transform_2(%arg0: i32) -> (i32, i32) {
    %c0_i32 = arith.constant 0 : i32
    %c0_i32_0 = arith.constant 0 : i32
    %c0_i32_1 = arith.constant 0 : i32
    return %c0_i32, %c0_i32_0 : i32, i32
  }
  func.func @transform_3(%arg0: i32) -> (i32, i32) {
    %c0_i32 = arith.constant 0 : i32
    %c0_i32_0 = arith.constant 0 : i32
    return %arg0, %c0_i32 : i32, i32
  }
  func.func @transform_4(%arg0: i32) -> (i32, i32) {
    %c0_i32 = arith.constant 0 : i32
    %c0_i32_0 = arith.constant 0 : i32
    return %arg0, %c0_i32 : i32, i32
  }
}

</mosaic_0001>

<llo_original>
// kernel: bottleneck_forward.4
$region0: #{bottleneck_forward.4}
  #allocation0 [shape = 'u32[]', space=smem, size = 0x4, offset = 0x4, fixed_abs, tag = 'smem constant byte address 0x4 - core index']
  #allocation1 [shape = 'u32[144,128]{1,0:T(1,128)}', space=vmem, size = 0x12000, scoped, tag = 'internal scratch']
  %s0 = inlined_call_operand.vmem [shape: bf16[128,128], index: 0, kind: input, shape index: {}]
  %s1 = inlined_call_operand.vmem [shape: bf16[128,128], index: 1, kind: input, shape index: {}]
  %s2 = inlined_call_operand.vmem [shape: f32[1,128], index: 2, kind: input, shape index: {}]
  %s3 = inlined_call_operand.vmem [shape: bf16[128,128], index: 3, kind: output, shape index: {}]
  %s4 = sld [smem:[#allocation0]]
  $region22: #{bottleneck_forward.4} parent=0
    _
  %s6 = ssub.s32 1, %s4
  %s7 = scalar_select 0, %s6, %s4
  // Predicated region
  $region2: #{bottleneck_forward.4} parent=0 // pred_check
    _
  $region3: #{bottleneck_forward.4} parent=0 // pred_check_branch
    %9 = sbr.rel (0) target = $region5
  $region4: #{bottleneck_forward.4} parent=0 // pred_region
    _
  $region5: #{bottleneck_forward.4} parent=0 // pred_fallthru
    _
  // Predicated region
  $region6: #{bottleneck_forward.4} parent=0 // pred_check
    _
  $region7: #{bottleneck_forward.4} parent=0 // pred_check_branch
    %11 = sbr.rel (0) target = $region9
  $region8: #{bottleneck_forward.4} parent=0 // pred_region
    _
  $region9: #{bottleneck_forward.4} parent=0 // pred_fallthru
    _
  // Predicated region
  $region10: #{bottleneck_forward.4} parent=0 // pred_check
    _
  $region11: #{bottleneck_forward.4} parent=0 // pred_check_branch
    %13 = sbr.rel (0) target = $region13
  $region12: #{bottleneck_forward.4} parent=0 // pred_region
    _
  $region13: #{bottleneck_forward.4} parent=0 // pred_fallthru
    _
  %v15 = vld [vmem:[%s0] sm:$0xf]
  %v16 = vld [vmem:[%s0 + $0x4] sm:$0xf]
  %v17 = vld [vmem:[%s0 + $0x8] sm:$0xf]
  %v18 = vld [vmem:[%s0 + $0xc] sm:$0xf]
  %v19 = vld [vmem:[%s0 + $0x10] sm:$0xf]
  %v20 = vld [vmem:[%s0 + $0x14] sm:$0xf]
  %v21 = vld [vmem:[%s0 + $0x18] sm:$0xf]
  %v22 = vld [vmem:[%s0 + $0x1c] sm:$0xf]
  %v23 = vld [vmem:[%s0 + $0x20] sm:$0xf]
  %v24 = vld [vmem:[%s0 + $0x24] sm:$0xf]
  %v25 = vld [vmem:[%s0 + $0x28] sm:$0xf]
  %v26 = vld [vmem:[%s0 + $0x2c] sm:$0xf]
  %v27 = vld [vmem:[%s0 + $0x30] sm:$0xf]
  %v28 = vld [vmem:[%s0 + $0x34] sm:$0xf]
  %v29 = vld [vmem:[%s0 + $0x38] sm:$0xf]
  %v30 = vld [vmem:[%s0 + $0x3c] sm:$0xf]
  %v31 = vld [vmem:[%s1] sm:$0xf]
  %v32 = vld [vmem:[%s1 + $0x4] sm:$0xf]
  %v33 = vld [vmem:[%s1 + $0x8] sm:$0xf]
  %v34 = vld [vmem:[%s1 + $0xc] sm:$0xf]
  %v35 = vld [vmem:[%s1 + $0x10] sm:$0xf]
  %v36 = vld [vmem:[%s1 + $0x14] sm:$0xf]
  %v37 = vld [vmem:[%s1 + $0x18] sm:$0xf]
  %v38 = vld [vmem:[%s1 + $0x1c] sm:$0xf]
  %v39 = vld [vmem:[%s1 + $0x20] sm:$0xf]
  %v40 = vld [vmem:[%s1 + $0x24] sm:$0xf]
  %v41 = vld [vmem:[%s1 + $0x28] sm:$0xf]
  %v42 = vld [vmem:[%s1 + $0x2c] sm:$0xf]
  %v43 = vld [vmem:[%s1 + $0x30] sm:$0xf]
  %v44 = vld [vmem:[%s1 + $0x34] sm:$0xf]
  %v45 = vld [vmem:[%s1 + $0x38] sm:$0xf]
  %v46 = vld [vmem:[%s1 + $0x3c] sm:$0xf]
  %v47 = vld [vmem:[%s2] sm:$0x1]
  %v49 = vlaneseq
  %v50 = vshrl.u32 %v49, 7
  %v51 = vsub.s32 0, %v50
  %v52 = vrot.slane %v47, %v51
  %v70 = vunpack.c.l.b16 %v15
  %v71 = vunpack.c.l.b16 %v16
  %v72 = vunpack.c.l.b16 %v17
  %v73 = vunpack.c.l.b16 %v18
  %v74 = vunpack.c.l.b16 %v19
  %v75 = vunpack.c.l.b16 %v20
  %v76 = vunpack.c.l.b16 %v21
  %v77 = vunpack.c.l.b16 %v22
  %v78 = vunpack.c.l.b16 %v23
  %v79 = vunpack.c.l.b16 %v24
  %v80 = vunpack.c.l.b16 %v25
  %v81 = vunpack.c.l.b16 %v26
  %v82 = vunpack.c.l.b16 %v27
  %v83 = vunpack.c.l.b16 %v28
  %v84 = vunpack.c.l.b16 %v29
  %v85 = vunpack.c.l.b16 %v30
  %v86 = vpack.c.b16 %v71, %v70
  %v87 = vpack.c.b16 %v73, %v72
  %v88 = vpack.c.b16 %v75, %v74
  %v89 = vpack.c.b16 %v77, %v76
  %v90 = vpack.c.b16 %v79, %v78
  %v91 = vpack.c.b16 %v81, %v80
  %v92 = vpack.c.b16 %v83, %v82
  %v93 = vpack.c.b16 %v85, %v84
  %v118 = vunpack.c.l.b16 %v31
  %v119 = vunpack.c.l.b16 %v32
  %v120 = vunpack.c.l.b16 %v33
  %v121 = vunpack.c.l.b16 %v34
  %v122 = vunpack.c.l.b16 %v35
  %v123 = vunpack.c.l.b16 %v36
  %v124 = vunpack.c.l.b16 %v37
  %v125 = vunpack.c.l.b16 %v38
  %v126 = vunpack.c.l.b16 %v39
  %v127 = vunpack.c.l.b16 %v40
  %v128 = vunpack.c.l.b16 %v41
  %v129 = vunpack.c.l.b16 %v42
  %v130 = vunpack.c.l.b16 %v43
  %v131 = vunpack.c.l.b16 %v44
  %v132 = vunpack.c.l.b16 %v45
  %v133 = vunpack.c.l.b16 %v46
  %v134 = vpack.c.b16 %v119, %v118
  %v135 = vpack.c.b16 %v121, %v120
  %v136 = vpack.c.b16 %v123, %v122
  %v137 = vpack.c.b16 %v125, %v124
  %v138 = vpack.c.b16 %v127, %v126
  %v139 = vpack.c.b16 %v129, %v128
  %v140 = vpack.c.b16 %v131, %v130
  %v141 = vpack.c.b16 %v133, %v132
  %150 = vmatprep.subr.bf16.mxu0 0
  %151 = vmatpush1.bf16.msra.mxu0 %v134
  %152 = vmatprep.subr.bf16.mxu0 0
  %153 = vmatpush1.bf16.msra.mxu0 %v135
  %154 = vmatprep.subr.bf16.mxu0 0
  %155 = vmatpush1.bf16.msra.mxu0 %v136
  %156 = vmatprep.subr.bf16.mxu0 0
  %157 = vmatpush1.bf16.msra.mxu0 %v137
  %158 = vmatprep.subr.bf16.mxu0 0
  %159 = vmatpush1.bf16.msra.mxu0 %v138
  %160 = vmatprep.subr.bf16.mxu0 0
  %161 = vmatpush1.bf16.msra.mxu0 %v139
  %162 = vmatprep.subr.bf16.mxu0 0
  %163 = vmatpush1.bf16.msra.mxu0 %v140
  %164 = vmatprep.subr.bf16.mxu0 0
  %165 = vmatpush1.bf16.msra.mxu0 %v141
  %166 = vmatprep.subr.bf16.mxu0 0
  %167 = vmatpush1.bf16.msra.mxu0 0
  %168 = vmatprep.subr.bf16.mxu0 0
  %169 = vmatpush1.bf16.msra.mxu0 0
  %170 = vmatprep.subr.bf16.mxu0 0
  %171 = vmatpush1.bf16.msra.mxu0 0
  %172 = vmatprep.subr.bf16.mxu0 0
  %173 = vmatpush1.bf16.msra.mxu0 0
  %174 = vmatprep.subr.bf16.mxu0 0
  %175 = vmatpush1.bf16.msra.mxu0 0
  %176 = vmatprep.subr.bf16.mxu0 0
  %177 = vmatpush1.bf16.msra.mxu0 0
  %178 = vmatprep.subr.bf16.mxu0 0
  %179 = vmatpush1.bf16.msra.mxu0 0
  %180 = vmatprep.subr.bf16.mxu0 0
  %181 = vmatpush1.bf16.msra.mxu0 0
  %182 = vmatprep.mubr.bf16.mxu0 0
  %183 = vmatmul.mubr.bf16.gmra.mrb[0].mxu0 %v86
  %v184 = vpop.f32.mrb[0].mxu0
  %v185 = vadd.f32 %v52, %v184
  %v186 = vpop.f32.mrb[0].mxu0
  %v187 = vpop.f32.mrb[0].mxu0
  %v188 = vadd.f32 %v52, %v187
  %v189 = vpop.f32.mrb[0].mxu0
  %190 = vmatprep.mubr.bf16.mxu0 0
  %191 = vmatmul.mubr.bf16.gmra.mrb[0].mxu0 %v87
  %v192 = vpop.f32.mrb[0].mxu0
  %v193 = vadd.f32 %v52, %v192
  %v194 = vpop.f32.mrb[0].mxu0
  %v195 = vpop.f32.mrb[0].mxu0
  %v196 = vadd.f32 %v52, %v195
  %v197 = vpop.f32.mrb[0].mxu0
  %198 = vmatprep.mubr.bf16.mxu0 0
  %199 = vmatmul.mubr.bf16.gmra.mrb[0].mxu0 %v88
  %v200 = vpop.f32.mrb[0].mxu0
  %v201 = vadd.f32 %v52, %v200
  %v202 = vpop.f32.mrb[0].mxu0
  %v203 = vpop.f32.mrb[0].mxu0
  %v204 = vadd.f32 %v52, %v203
  %v205 = vpop.f32.mrb[0].mxu0
  %206 = vmatprep.mubr.bf16.mxu0 0
  %207 = vmatmul.mubr.bf16.gmra.mrb[0].mxu0 %v89
  %v208 = vpop.f32.mrb[0].mxu0
  %v209 = vadd.f32 %v52, %v208
  %v210 = vpop.f32.mrb[0].mxu0
  %v211 = vpop.f32.mrb[0].mxu0
  %v212 = vadd.f32 %v52, %v211
  %v213 = vpop.f32.mrb[0].mxu0
  %214 = vmatprep.mubr.bf16.mxu0 0
  %215 = vmatmul.mubr.bf16.gmra.mrb[0].mxu0 %v90
  %v216 = vpop.f32.mrb[0].mxu0
  %v217 = vadd.f32 %v52, %v216
  %v218 = vpop.f32.mrb[0].mxu0
  %v219 = vpop.f32.mrb[0].mxu0
  %v220 = vadd.f32 %v52, %v219
  %v221 = vpop.f32.mrb[0].mxu0
  %222 = vmatprep.mubr.bf16.mxu0 0
  %223 = vmatmul.mubr.bf16.gmra.mrb[0].mxu0 %v91
  %v224 = vpop.f32.mrb[0].mxu0
  %v225 = vadd.f32 %v52, %v224
  %v226 = vpop.f32.mrb[0].mxu0
  %v227 = vpop.f32.mrb[0].mxu0
  %v228 = vadd.f32 %v52, %v227
  %v229 = vpop.f32.mrb[0].mxu0
  %230 = vmatprep.mubr.bf16.mxu0 0
  %231 = vmatmul.mubr.bf16.gmra.mrb[0].mxu0 %v92
  %v232 = vpop.f32.mrb[0].mxu0
  %v233 = vadd.f32 %v52, %v232
  %v234 = vpop.f32.mrb[0].mxu0
  %v235 = vpop.f32.mrb[0].mxu0
  %v236 = vadd.f32 %v52, %v235
  %v237 = vpop.f32.mrb[0].mxu0
  %238 = vmatprep.mubr.bf16.mxu0 0
  %239 = vmatmul.mubr.bf16.gmra.mrb[0].mxu0 %v93
  %v240 = vpop.f32.mrb[0].mxu0
  %v241 = vadd.f32 %v52, %v240
  %v242 = vpop.f32.mrb[0].mxu0
  %v243 = vpop.f32.mrb[0].mxu0
  %v244 = vadd.f32 %v52, %v243
  %v245 = vpop.f32.mrb[0].mxu0
  %246 = vdwg.mxu0
  %v247 = vmax.f32 %v185, 0.0
  %v248 = vmax.f32 %v188, 0.0
  %v249 = vmax.f32 %v193, 0.0
  %v250 = vmax.f32 %v196, 0.0
  %v251 = vmax.f32 %v201, 0.0
  %v252 = vmax.f32 %v204, 0.0
  %v253 = vmax.f32 %v209, 0.0
  %v254 = vmax.f32 %v212, 0.0
  %v255 = vmax.f32 %v217, 0.0
  %v256 = vmax.f32 %v220, 0.0
  %v257 = vmax.f32 %v225, 0.0
  %v258 = vmax.f32 %v228, 0.0
  %v259 = vmax.f32 %v233, 0.0
  %v260 = vmax.f32 %v236, 0.0
  %v261 = vmax.f32 %v241, 0.0
  %v262 = vmax.f32 %v244, 0.0
  %v263 = vpack.c.bf16 %v248, %v247
  %v264 = vpack.c.bf16 %v250, %v249
  %v265 = vpack.c.bf16 %v252, %v251
  %v266 = vpack.c.bf16 %v254, %v253
  %v267 = vpack.c.bf16 %v256, %v255
  %v268 = vpack.c.bf16 %v258, %v257
  %v269 = vpack.c.bf16 %v260, %v259
  %v270 = vpack.c.bf16 %v262, %v261
  %v279 = vunpack.c.l.b16 %v263
  %v280 = vunpack.c.h.b16 %v263
  %v281 = vunpack.c.l.b16 %v264
  %v282 = vunpack.c.h.b16 %v264
  %v283 = vunpack.c.l.b16 %v265
  %v284 = vunpack.c.h.b16 %v265
  %v285 = vunpack.c.l.b16 %v266
  %v286 = vunpack.c.h.b16 %v266
  %v287 = vunpack.c.l.b16 %v267
  %v288 = vunpack.c.h.b16 %v267
  %v289 = vunpack.c.l.b16 %v268
  %v290 = vunpack.c.h.b16 %v268
  %v291 = vunpack.c.l.b16 %v269
  %v292 = vunpack.c.h.b16 %v269
  %v293 = vunpack.c.l.b16 %v270
  %v294 = vunpack.c.h.b16 %v270
  %v295 = vpack.c.b16 %v279, %v279
  %v296 = vpack.c.b16 %v280, %v280
  %v297 = vpack.c.b16 %v281, %v281
  %v298 = vpack.c.b16 %v282, %v282
  %v299 = vpack.c.b16 %v283, %v283
  %v300 = vpack.c.b16 %v284, %v284
  %v301 = vpack.c.b16 %v285, %v285
  %v302 = vpack.c.b16 %v286, %v286
  %v303 = vpack.c.b16 %v287, %v287
  %v304 = vpack.c.b16 %v288, %v288
  %v305 = vpack.c.b16 %v289, %v289
  %v306 = vpack.c.b16 %v290, %v290
  %v307 = vpack.c.b16 %v291, %v291
  %v308 = vpack.c.b16 %v292, %v292
  %v309 = vpack.c.b16 %v293, %v293
  %v310 = vpack.c.b16 %v294, %v294
  %327 = vst [vmem:[%s3] sm:$0xf] %v295
  %328 = vst [vmem:[%s3 + $0x4] sm:$0xf] %v296
  %329 = vst [vmem:[%s3 + $0x8] sm:$0xf] %v297
  %330 = vst [vmem:[%s3 + $0xc] sm:$0xf] %v298
  %331 = vst [vmem:[%s3 + $0x10] sm:$0xf] %v299
  %332 = vst [vmem:[%s3 + $0x14] sm:$0xf] %v300
  %333 = vst [vmem:[%s3 + $0x18] sm:$0xf] %v301
  %334 = vst [vmem:[%s3 + $0x1c] sm:$0xf] %v302
  %335 = vst [vmem:[%s3 + $0x20] sm:$0xf] %v303
  %336 = vst [vmem:[%s3 + $0x24] sm:$0xf] %v304
  %337 = vst [vmem:[%s3 + $0x28] sm:$0xf] %v305
  %338 = vst [vmem:[%s3 + $0x2c] sm:$0xf] %v306
  %339 = vst [vmem:[%s3 + $0x30] sm:$0xf] %v307
  %340 = vst [vmem:[%s3 + $0x34] sm:$0xf] %v308
  %341 = vst [vmem:[%s3 + $0x38] sm:$0xf] %v309
  %342 = vst [vmem:[%s3 + $0x3c] sm:$0xf] %v310
  // Predicated region
  $region14: #{bottleneck_forward.4} parent=0 // pred_check
    _
  $region15: #{bottleneck_forward.4} parent=0 // pred_check_branch
    %344 = sbr.rel (0) target = $region17
  $region16: #{bottleneck_forward.4} parent=0 // pred_region
    _
  $region17: #{bottleneck_forward.4} parent=0 // pred_fallthru
    _
  // Predicated region
  $region18: #{bottleneck_forward.4} parent=0 // pred_check
    _
  $region19: #{bottleneck_forward.4} parent=0 // pred_check_branch
    %346 = sbr.rel (0) target = $region21
  $region20: #{bottleneck_forward.4} parent=0 // pred_region
    _
  $region21: #{bottleneck_forward.4} parent=0 // pred_fallthru
    _

// kernel: bottleneck_forward.6
$region0: #{bottleneck_forward.6}
  #allocation0 [shape = 'u32[]', space=smem, size = 0x4, offset = 0x4, fixed_abs, tag = 'smem constant byte address 0x4 - core index']
  #allocation1 [shape = 'u32[144,128]{1,0:T(1,128)}', space=vmem, size = 0x12000, scoped, tag = 'internal scratch']
  %s0 = inlined_call_operand.vmem [shape: bf16[32,128], index: 0, kind: input, shape index: {}]
  %s1 = inlined_call_operand.vmem [shape: bf16[128,128], index: 1, kind: input, shape index: {}]
  %s2 = inlined_call_operand.vmem [shape: f32[1,128], index: 2, kind: input, shape index: {}]
  %s3 = inlined_call_operand.vmem [shape: bf16[32,128], index: 3, kind: output, shape index: {}]
  %s4 = sld [smem:[#allocation0]]
  $region22: #{bottleneck_forward.6} parent=0
    _
  %s6 = ssub.s32 1, %s4
  %s7 = scalar_select 0, %s6, %s4
  // Predicated region
  $region2: #{bottleneck_forward.6} parent=0 // pred_check
    _
  $region3: #{bottleneck_forward.6} parent=0 // pred_check_branch
    %9 = sbr.rel (0) target = $region5
  $region4: #{bottleneck_forward.6} parent=0 // pred_region
    _
  $region5: #{bottleneck_forward.6} parent=0 // pred_fallthru
    _
  // Predicated region
  $region6: #{bottleneck_forward.6} parent=0 // pred_check
    _
  $region7: #{bottleneck_forward.6} parent=0 // pred_check_branch
    %11 = sbr.rel (0) target = $region9
  $region8: #{bottleneck_forward.6} parent=0 // pred_region
    _
  $region9: #{bottleneck_forward.6} parent=0 // pred_fallthru
    _
  // Predicated region
  $region10: #{bottleneck_forward.6} parent=0 // pred_check
    _
  $region11: #{bottleneck_forward.6} parent=0 // pred_check_branch
    %13 = sbr.rel (0) target = $region13
  $region12: #{bottleneck_forward.6} parent=0 // pred_region
    _
  $region13: #{bottleneck_forward.6} parent=0 // pred_fallthru
    _
  %v15 = vld [vmem:[%s0] sm:$0xf]
  %v16 = vld [vmem:[%s0 + $0x4] sm:$0xf]
  %v17 = vld [vmem:[%s0 + $0x8] sm:$0xf]
  %v18 = vld [vmem:[%s0 + $0xc] sm:$0xf]
  %v19 = vld [vmem:[%s1] sm:$0xf]
  %v20 = vld [vmem:[%s1 + $0x4] sm:$0xf]
  %v21 = vld [vmem:[%s1 + $0x8] sm:$0xf]
  %v22 = vld [vmem:[%s1 + $0xc] sm:$0xf]
  %v23 = vld [vmem:[%s1 + $0x10] sm:$0xf]
  %v24 = vld [vmem:[%s1 + $0x14] sm:$0xf]
  %v25 = vld [vmem:[%s1 + $0x18] sm:$0xf]
  %v26 = vld [vmem:[%s1 + $0x1c] sm:$0xf]
  %v27 = vld [vmem:[%s1 + $0x20] sm:$0xf]
  %v28 = vld [vmem:[%s1 + $0x24] sm:$0xf]
  %v29 = vld [vmem:[%s1 + $0x28] sm:$0xf]
  %v30 = vld [vmem:[%s1 + $0x2c] sm:$0xf]
  %v31 = vld [vmem:[%s1 + $0x30] sm:$0xf]
  %v32 = vld [vmem:[%s1 + $0x34] sm:$0xf]
  %v33 = vld [vmem:[%s1 + $0x38] sm:$0xf]
  %v34 = vld [vmem:[%s1 + $0x3c] sm:$0xf]
  %v35 = vld [vmem:[%s2] sm:$0x1]
  %v37 = vlaneseq
  %v38 = vshrl.u32 %v37, 7
  %v39 = vsub.s32 0, %v38
  %v40 = vrot.slane %v35, %v39
  %v46 = vunpack.c.l.b16 %v15
  %v47 = vunpack.c.l.b16 %v16
  %v48 = vunpack.c.l.b16 %v17
  %v49 = vunpack.c.l.b16 %v18
  %v50 = vpack.c.b16 %v47, %v46
  %v51 = vpack.c.b16 %v49, %v48
  %v70 = vunpack.c.l.b16 %v19
  %v71 = vunpack.c.l.b16 %v20
  %v72 = vunpack.c.l.b16 %v21
  %v73 = vunpack.c.l.b16 %v22
  %v74 = vunpack.c.l.b16 %v23
  %v75 = vunpack.c.l.b16 %v24
  %v76 = vunpack.c.l.b16 %v25
  %v77 = vunpack.c.l.b16 %v26
  %v78 = vunpack.c.l.b16 %v27
  %v79 = vunpack.c.l.b16 %v28
  %v80 = vunpack.c.l.b16 %v29
  %v81 = vunpack.c.l.b16 %v30
  %v82 = vunpack.c.l.b16 %v31
  %v83 = vunpack.c.l.b16 %v32
  %v84 = vunpack.c.l.b16 %v33
  %v85 = vunpack.c.l.b16 %v34
  %v86 = vpack.c.b16 %v71, %v70
  %v87 = vpack.c.b16 %v73, %v72
  %v88 = vpack.c.b16 %v75, %v74
  %v89 = vpack.c.b16 %v77, %v76
  %v90 = vpack.c.b16 %v79, %v78
  %v91 = vpack.c.b16 %v81, %v80
  %v92 = vpack.c.b16 %v83, %v82
  %v93 = vpack.c.b16 %v85, %v84
  %102 = vmatprep.subr.bf16.mxu0 0
  %103 = vmatpush1.bf16.msra.mxu0 %v86
  %104 = vmatprep.subr.bf16.mxu0 0
  %105 = vmatpush1.bf16.msra.mxu0 %v87
  %106 = vmatprep.subr.bf16.mxu0 0
  %107 = vmatpush1.bf16.msra.mxu0 %v88
  %108 = vmatprep.subr.bf16.mxu0 0
  %109 = vmatpush1.bf16.msra.mxu0 %v89
  %110 = vmatprep.subr.bf16.mxu0 0
  %111 = vmatpush1.bf16.msra.mxu0 %v90
  %112 = vmatprep.subr.bf16.mxu0 0
  %113 = vmatpush1.bf16.msra.mxu0 %v91
  %114 = vmatprep.subr.bf16.mxu0 0
  %115 = vmatpush1.bf16.msra.mxu0 %v92
  %116 = vmatprep.subr.bf16.mxu0 0
  %117 = vmatpush1.bf16.msra.mxu0 %v93
  %118 = vmatprep.subr.bf16.mxu0 0
  %119 = vmatpush1.bf16.msra.mxu0 0
  %120 = vmatprep.subr.bf16.mxu0 0
  %121 = vmatpush1.bf16.msra.mxu0 0
  %122 = vmatprep.subr.bf16.mxu0 0
  %123 = vmatpush1.bf16.msra.mxu0 0
  %124 = vmatprep.subr.bf16.mxu0 0
  %125 = vmatpush1.bf16.msra.mxu0 0
  %126 = vmatprep.subr.bf16.mxu0 0
  %127 = vmatpush1.bf16.msra.mxu0 0
  %128 = vmatprep.subr.bf16.mxu0 0
  %129 = vmatpush1.bf16.msra.mxu0 0
  %130 = vmatprep.subr.bf16.mxu0 0
  %131 = vmatpush1.bf16.msra.mxu0 0
  %132 = vmatprep.subr.bf16.mxu0 0
  %133 = vmatpush1.bf16.msra.mxu0 0
  %134 = vmatprep.mubr.bf16.mxu0 0
  %135 = vmatmul.mubr.bf16.gmra.mrb[0].mxu0 %v50
  %v136 = vpop.f32.mrb[0].mxu0
  %v137 = vadd.f32 %v40, %v136
  %v138 = vpop.f32.mrb[0].mxu0
  %v139 = vpop.f32.mrb[0].mxu0
  %v140 = vadd.f32 %v40, %v139
  %v141 = vpop.f32.mrb[0].mxu0
  %142 = vmatprep.mubr.bf16.mxu0 0
  %143 = vmatmul.mubr.bf16.gmra.mrb[0].mxu0 %v51
  %v144 = vpop.f32.mrb[0].mxu0
  %v145 = vadd.f32 %v40, %v144
  %v146 = vpop.f32.mrb[0].mxu0
  %v147 = vpop.f32.mrb[0].mxu0
  %v148 = vadd.f32 %v40, %v147
  %v149 = vpop.f32.mrb[0].mxu0
  %150 = vdwg.mxu0
  %v151 = vpack.c.bf16 %v140, %v137
  %v152 = vpack.c.bf16 %v148, %v145
  %v155 = vunpack.c.l.b16 %v151
  %v156 = vunpack.c.h.b16 %v151
  %v157 = vunpack.c.l.b16 %v152
  %v158 = vunpack.c.h.b16 %v152
  %v159 = vpack.c.b16 %v155, %v155
  %v160 = vpack.c.b16 %v156, %v156
  %v161 = vpack.c.b16 %v157, %v157
  %v162 = vpack.c.b16 %v158, %v158
  %167 = vst [vmem:[%s3] sm:$0xf] %v159
  %168 = vst [vmem:[%s3 + $0x4] sm:$0xf] %v160
  %169 = vst [vmem:[%s3 + $0x8] sm:$0xf] %v161
  %170 = vst [vmem:[%s3 + $0xc] sm:$0xf] %v162
  // Predicated region
  $region14: #{bottleneck_forward.6} parent=0 // pred_check
    _
  $region15: #{bottleneck_forward.6} parent=0 // pred_check_branch
    %172 = sbr.rel (0) target = $region17
  $region16: #{bottleneck_forward.6} parent=0 // pred_region
    _
  $region17: #{bottleneck_forward.6} parent=0 // pred_fallthru
    _
  // Predicated region
  $region18: #{bottleneck_forward.6} parent=0 // pred_check
    _
  $region19: #{bottleneck_forward.6} parent=0 // pred_check_branch
    %174 = sbr.rel (0) target = $region21
  $region20: #{bottleneck_forward.6} parent=0 // pred_region
    _
  $region21: #{bottleneck_forward.6} parent=0 // pred_fallthru
    _

// kernel: bottleneck_forward.7
$region0: #{bottleneck_forward.7}
  #allocation0 [shape = 'u32[]', space=smem, size = 0x4, offset = 0x4, fixed_abs, tag = 'smem constant byte address 0x4 - core index']
  #allocation1 [shape = 'u32[144,128]{1,0:T(1,128)}', space=vmem, size = 0x12000, scoped, tag = 'internal scratch']
  %s0 = inlined_call_operand.vmem [shape: bf16[32,128], index: 0, kind: input, shape index: {}]
  %s1 = inlined_call_operand.vmem [shape: bf16[128,128], index: 1, kind: input, shape index: {}]
  %s2 = inlined_call_operand.vmem [shape: f32[1,128], index: 2, kind: input, shape index: {}]
  %s3 = inlined_call_operand.vmem [shape: bf16[32,128], index: 3, kind: input, shape index: {}]
  %s4 = inlined_call_operand.vmem [shape: bf16[32,128], index: 4, kind: output, shape index: {}]
  %s5 = sld [smem:[#allocation0]]
  $region26: #{bottleneck_forward.7} parent=0
    _
  %s7 = ssub.s32 1, %s5
  %s8 = scalar_select 0, %s7, %s5
  // Predicated region
  $region2: #{bottleneck_forward.7} parent=0 // pred_check
    _
  $region3: #{bottleneck_forward.7} parent=0 // pred_check_branch
    %10 = sbr.rel (0) target = $region5
  $region4: #{bottleneck_forward.7} parent=0 // pred_region
    _
  $region5: #{bottleneck_forward.7} parent=0 // pred_fallthru
    _
  // Predicated region
  $region6: #{bottleneck_forward.7} parent=0 // pred_check
    _
  $region7: #{bottleneck_forward.7} parent=0 // pred_check_branch
    %12 = sbr.rel (0) target = $region9
  $region8: #{bottleneck_forward.7} parent=0 // pred_region
    _
  $region9: #{bottleneck_forward.7} parent=0 // pred_fallthru
    _
  // Predicated region
  $region10: #{bottleneck_forward.7} parent=0 // pred_check
    _
  $region11: #{bottleneck_forward.7} parent=0 // pred_check_branch
    %14 = sbr.rel (0) target = $region13
  $region12: #{bottleneck_forward.7} parent=0 // pred_region
    _
  $region13: #{bottleneck_forward.7} parent=0 // pred_fallthru
    _
  // Predicated region
  $region14: #{bottleneck_forward.7} parent=0 // pred_check
    _
  $region15: #{bottleneck_forward.7} parent=0 // pred_check_branch
    %16 = sbr.rel (0) target = $region17
  $region16: #{bottleneck_forward.7} parent=0 // pred_region
    _
  $region17: #{bottleneck_forward.7} parent=0 // pred_fallthru
    _
  %v18 = vld [vmem:[%s0] sm:$0xf]
  %v19 = vld [vmem:[%s0 + $0x4] sm:$0xf]
  %v20 = vld [vmem:[%s0 + $0x8] sm:$0xf]
  %v21 = vld [vmem:[%s0 + $0xc] sm:$0xf]
  %v22 = vld [vmem:[%s1] sm:$0xf]
  %v23 = vld [vmem:[%s1 + $0x4] sm:$0xf]
  %v24 = vld [vmem:[%s1 + $0x8] sm:$0xf]
  %v25 = vld [vmem:[%s1 + $0xc] sm:$0xf]
  %v26 = vld [vmem:[%s1 + $0x10] sm:$0xf]
  %v27 = vld [vmem:[%s1 + $0x14] sm:$0xf]
  %v28 = vld [vmem:[%s1 + $0x18] sm:$0xf]
  %v29 = vld [vmem:[%s1 + $0x1c] sm:$0xf]
  %v30 = vld [vmem:[%s1 + $0x20] sm:$0xf]
  %v31 = vld [vmem:[%s1 + $0x24] sm:$0xf]
  %v32 = vld [vmem:[%s1 + $0x28] sm:$0xf]
  %v33 = vld [vmem:[%s1 + $0x2c] sm:$0xf]
  %v34 = vld [vmem:[%s1 + $0x30] sm:$0xf]
  %v35 = vld [vmem:[%s1 + $0x34] sm:$0xf]
  %v36 = vld [vmem:[%s1 + $0x38] sm:$0xf]
  %v37 = vld [vmem:[%s1 + $0x3c] sm:$0xf]
  %v38 = vld [vmem:[%s2] sm:$0x1]
  %v40 = vlaneseq
  %v41 = vshrl.u32 %v40, 7
  %v42 = vsub.s32 0, %v41
  %v43 = vrot.slane %v38, %v42
  %v49 = vunpack.c.l.b16 %v18
  %v50 = vunpack.c.l.b16 %v19
  %v51 = vunpack.c.l.b16 %v20
  %v52 = vunpack.c.l.b16 %v21
  %v53 = vpack.c.b16 %v50, %v49
  %v54 = vpack.c.b16 %v52, %v51
  %v73 = vunpack.c.l.b16 %v22
  %v74 = vunpack.c.l.b16 %v23
  %v75 = vunpack.c.l.b16 %v24
  %v76 = vunpack.c.l.b16 %v25
  %v77 = vunpack.c.l.b16 %v26
  %v78 = vunpack.c.l.b16 %v27
  %v79 = vunpack.c.l.b16 %v28
  %v80 = vunpack.c.l.b16 %v29
  %v81 = vunpack.c.l.b16 %v30
  %v82 = vunpack.c.l.b16 %v31
  %v83 = vunpack.c.l.b16 %v32
  %v84 = vunpack.c.l.b16 %v33
  %v85 = vunpack.c.l.b16 %v34
  %v86 = vunpack.c.l.b16 %v35
  %v87 = vunpack.c.l.b16 %v36
  %v88 = vunpack.c.l.b16 %v37
  %v89 = vpack.c.b16 %v74, %v73
  %v90 = vpack.c.b16 %v76, %v75
  %v91 = vpack.c.b16 %v78, %v77
  %v92 = vpack.c.b16 %v80, %v79
  %v93 = vpack.c.b16 %v82, %v81
  %v94 = vpack.c.b16 %v84, %v83
  %v95 = vpack.c.b16 %v86, %v85
  %v96 = vpack.c.b16 %v88, %v87
  %105 = vmatprep.subr.bf16.mxu0 0
  %106 = vmatpush1.bf16.msra.mxu0 %v89
  %107 = vmatprep.subr.bf16.mxu0 0
  %108 = vmatpush1.bf16.msra.mxu0 %v90
  %109 = vmatprep.subr.bf16.mxu0 0
  %110 = vmatpush1.bf16.msra.mxu0 %v91
  %111 = vmatprep.subr.bf16.mxu0 0
  %112 = vmatpush1.bf16.msra.mxu0 %v92
  %113 = vmatprep.subr.bf16.mxu0 0
  %114 = vmatpush1.bf16.msra.mxu0 %v93
  %115 = vmatprep.subr.bf16.mxu0 0
  %116 = vmatpush1.bf16.msra.mxu0 %v94
  %117 = vmatprep.subr.bf16.mxu0 0
  %118 = vmatpush1.bf16.msra.mxu0 %v95
  %119 = vmatprep.subr.bf16.mxu0 0
  %120 = vmatpush1.bf16.msra.mxu0 %v96
  %121 = vmatprep.subr.bf16.mxu0 0
  %122 = vmatpush1.bf16.msra.mxu0 0
  %123 = vmatprep.subr.bf16.mxu0 0
  %124 = vmatpush1.bf16.msra.mxu0 0
  %125 = vmatprep.subr.bf16.mxu0 0
  %126 = vmatpush1.bf16.msra.mxu0 0
  %127 = vmatprep.subr.bf16.mxu0 0
  %128 = vmatpush1.bf16.msra.mxu0 0
  %129 = vmatprep.subr.bf16.mxu0 0
  %130 = vmatpush1.bf16.msra.mxu0 0
  %131 = vmatprep.subr.bf16.mxu0 0
  %132 = vmatpush1.bf16.msra.mxu0 0
  %133 = vmatprep.subr.bf16.mxu0 0
  %134 = vmatpush1.bf16.msra.mxu0 0
  %135 = vmatprep.subr.bf16.mxu0 0
  %136 = vmatpush1.bf16.msra.mxu0 0
  %137 = vmatprep.mubr.bf16.mxu0 0
  %138 = vmatmul.mubr.bf16.gmra.mrb[0].mxu0 %v53
  %v139 = vpop.f32.mrb[0].mxu0
  %v140 = vadd.f32 %v43, %v139
  %v141 = vpop.f32.mrb[0].mxu0
  %v142 = vpop.f32.mrb[0].mxu0
  %v143 = vadd.f32 %v43, %v142
  %v144 = vpop.f32.mrb[0].mxu0
  %145 = vmatprep.mubr.bf16.mxu0 0
  %146 = vmatmul.mubr.bf16.gmra.mrb[0].mxu0 %v54
  %v147 = vpop.f32.mrb[0].mxu0
  %v148 = vadd.f32 %v43, %v147
  %v149 = vpop.f32.mrb[0].mxu0
  %v150 = vpop.f32.mrb[0].mxu0
  %v151 = vadd.f32 %v43, %v150
  %v152 = vpop.f32.mrb[0].mxu0
  %153 = vdwg.mxu0
  %v154 = vld [vmem:[%s3] sm:$0xf]
  %v155 = vld [vmem:[%s3 + $0x4] sm:$0xf]
  %v156 = vld [vmem:[%s3 + $0x8] sm:$0xf]
  %v157 = vld [vmem:[%s3 + $0xc] sm:$0xf]
  %v158 = vunpack.c.l.bf16 %v154
  %v159 = vunpack.c.l.bf16 %v155
  %v160 = vunpack.c.l.bf16 %v156
  %v161 = vunpack.c.l.bf16 %v157
  %v162 = vadd.f32 %v140, %v158
  %v163 = vadd.f32 %v143, %v159
  %v164 = vadd.f32 %v148, %v160
  %v165 = vadd.f32 %v151, %v161
  %v166 = vmax.f32 %v162, 0.0
  %v167 = vmax.f32 %v163, 0.0
  %v168 = vmax.f32 %v164, 0.0
  %v169 = vmax.f32 %v165, 0.0
  %v170 = vpack.c.bf16 %v167, %v166
  %v171 = vpack.c.bf16 %v169, %v168
  %v174 = vunpack.c.l.b16 %v170
  %v175 = vunpack.c.h.b16 %v170
  %v176 = vunpack.c.l.b16 %v171
  %v177 = vunpack.c.h.b16 %v171
  %v178 = vpack.c.b16 %v174, %v174
  %v179 = vpack.c.b16 %v175, %v175
  %v180 = vpack.c.b16 %v176, %v176
  %v181 = vpack.c.b16 %v177, %v177
  %186 = vst [vmem:[%s4] sm:$0xf] %v178
  %187 = vst [vmem:[%s4 + $0x4] sm:$0xf] %v179
  %188 = vst [vmem:[%s4 + $0x8] sm:$0xf] %v180
  %189 = vst [vmem:[%s4 + $0xc] sm:$0xf] %v181
  // Predicated region
  $region18: #{bottleneck_forward.7} parent=0 // pred_check
    _
  $region19: #{bottleneck_forward.7} parent=0 // pred_check_branch
    %191 = sbr.rel (0) target = $region21
  $region20: #{bottleneck_forward.7} parent=0 // pred_region
    _
  $region21: #{bottleneck_forward.7} parent=0 // pred_fallthru
    _
  // Predicated region
  $region22: #{bottleneck_forward.7} parent=0 // pred_check
    _
  $region23: #{bottleneck_forward.7} parent=0 // pred_check_branch
    %193 = sbr.rel (0) target = $region25
  $region24: #{bottleneck_forward.7} parent=0 // pred_region
    _
  $region25: #{bottleneck_forward.7} parent=0 // pred_fallthru
    _

// kernel: bottleneck_forward.5
$region0: #{bottleneck_forward.5}
  #allocation0 [shape = 'u32[]', space=smem, size = 0x4, offset = 0x4, fixed_abs, tag = 'smem constant byte address 0x4 - core index']
  #allocation1 [shape = 'u32[144,128]{1,0:T(1,128)}', space=vmem, size = 0x12000, scoped, tag = 'internal scratch']
  #allocation2 [shape = 'f32[20,128]{1,0:T(8,128)}', space=vmem, size = 0x3000, scoped, tag = 'scratch operand']
  %s0 = inlined_call_operand.vmem [shape: bf16[2,4,30,128], index: 0, kind: input, shape index: {}]
  %s1 = inlined_call_operand.vmem [shape: bf16[9,128,128], index: 1, kind: input, shape index: {}]
  %s2 = inlined_call_operand.vmem [shape: f32[1,128], index: 2, kind: input, shape index: {}]
  %s3 = inlined_call_operand.vmem [shape: bf16[2,20,128], index: 3, kind: output, shape index: {}]
  %s4 = sld [smem:[#allocation0]]
  $region45: #{bottleneck_forward.5} parent=0
    _
  %s6 = ssub.s32 1, %s4
  %s7 = scalar_select 0, %s6, %s4
  loop: start=0, step=1, limit=4
  $region2: #{bottleneck_forward.5} parent=0 // loop_pre_header
    _
  $region3: #{bottleneck_forward.5} parent=0 // loop_header
    %s9 = sphi 0, %s13
    %p10 = scmp.ge.s32.totalorder %s9, 4
    %s19 = sphi 0, %s21
    %s22 = sphi 0, %s19
    %s23 = sphi 0, %s22
    %s39 = sphi 0, %s23
    %s43 = sphi 0, %s43
    %s45 = sphi 0, %s43
    %s46 = sphi 0, %s45
    %s60 = sphi 0, %s46
    %s64 = sphi 0, %s64
    %s66 = sphi 0, %s64
    %s67 = sphi 0, %s66
    %s81 = sphi 0, %s67
    %s87 = sphi 0, %s89
    %s90 = sphi 0, %s87
    %s91 = sphi 0, %s90
    %s107 = sphi 0, %s91
  $region4: #{bottleneck_forward.5} parent=0 // loop_header_branch
    %12 = sbr.rel (%p10) target = $region8
  $region5: #{bottleneck_forward.5} parent=0 // loop_body
    %s14 = ssub.s32 %s9, 1
    %s15 = ssub.s32 %s9, 2
    %s16 = sadd.s32 %s9, 1
    %s17 = ssub.s32 %s9, %s16
    %p18 = scmp.eq.s32.totalorder %s17, 0
    %s20 = sadd.s32 %s19, 1
    %s21 = scalar_select %p18, %s19, %s20
    %p24 = pneg %p18
    %p25 = scmp.eq.s32.totalorder %s9, 1
    %p26 = por %p24, %p25
    %p27 = scmp.ne.s32.totalorder %s19, %s22
    %p28 = scmp.eq.s32.totalorder %s9, 0
    %p29 = por %p27, %p28
    %p30 = scmp.ne.s32.totalorder %s19, %s22
    %p31 = scmp.eq.s32.totalorder %s14, 1
    %p32 = por %p30, %p31
    %p33 = scmp.ne.s32.totalorder %s22, %s23
    %p34 = scmp.eq.s32.totalorder %s14, 0
    %p35 = por %p33, %p34
    %p36 = scmp.ne.s32.totalorder %s22, %s23
    %p37 = scmp.eq.s32.totalorder %s15, 1
    %p38 = por %p36, %p37
    %p40 = scmp.ne.s32.totalorder %s23, %s39
    %p41 = scmp.eq.s32.totalorder %s15, 0
    %p42 = por %p40, %p41
    %s44 = sadd.s32 %s43, 1
    %p47 = scmp.eq.s32.totalorder %s9, 1
    %p48 = scmp.ne.s32.totalorder %s43, %s45
    %p49 = scmp.eq.s32.totalorder %s9, 0
    %p50 = por %p48, %p49
    %p51 = scmp.ne.s32.totalorder %s43, %s45
    %p52 = scmp.eq.s32.totalorder %s14, 1
    %p53 = por %p51, %p52
    %p54 = scmp.ne.s32.totalorder %s45, %s46
    %p55 = scmp.eq.s32.totalorder %s14, 0
    %p56 = por %p54, %p55
    %p57 = scmp.ne.s32.totalorder %s45, %s46
    %p58 = scmp.eq.s32.totalorder %s15, 1
    %p59 = por %p57, %p58
    %p61 = scmp.ne.s32.totalorder %s46, %s60
    %p62 = scmp.eq.s32.totalorder %s15, 0
    %p63 = por %p61, %p62
    %s65 = sadd.s32 %s64, 1
    %p68 = scmp.eq.s32.totalorder %s9, 1
    %p69 = scmp.ne.s32.totalorder %s64, %s66
    %p70 = scmp.eq.s32.totalorder %s9, 0
    %p71 = por %p69, %p70
    %p72 = scmp.ne.s32.totalorder %s64, %s66
    %p73 = scmp.eq.s32.totalorder %s14, 1
    %p74 = por %p72, %p73
    %p75 = scmp.ne.s32.totalorder %s66, %s67
    %p76 = scmp.eq.s32.totalorder %s14, 0
    %p77 = por %p75, %p76
    %p78 = scmp.ne.s32.totalorder %s66, %s67
    %p79 = scmp.eq.s32.totalorder %s15, 1
    %p80 = por %p78, %p79
    %p82 = scmp.ne.s32.totalorder %s67, %s81
    %p83 = scmp.eq.s32.totalorder %s15, 0
    %p84 = por %p82, %p83
    %s85 = ssub.s32 %s9, %s16
    %p86 = scmp.eq.s32.totalorder %s85, 0
    %s88 = sadd.s32 %s87, 1
    %s89 = scalar_select %p86, %s87, %s88
    %p92 = pneg %p86
    %p93 = scmp.eq.s32.totalorder %s9, 1
    %p94 = por %p92, %p93
    %p95 = scmp.ne.s32.totalorder %s87, %s90
    %p96 = scmp.eq.s32.totalorder %s9, 0
    %p97 = por %p95, %p96
    %p98 = scmp.ne.s32.totalorder %s87, %s90
    %p99 = scmp.eq.s32.totalorder %s14, 1
    %p100 = por %p98, %p99
    %p101 = scmp.ne.s32.totalorder %s90, %s91
    %p102 = scmp.eq.s32.totalorder %s14, 0
    %p103 = por %p101, %p102
    %p104 = scmp.ne.s32.totalorder %s90, %s91
    %p105 = scmp.eq.s32.totalorder %s15, 1
    %p106 = por %p104, %p105
    %p108 = scmp.ne.s32.totalorder %s91, %s107
    %p109 = scmp.eq.s32.totalorder %s15, 0
    %p110 = por %p108, %p109
    %p111 = scmp.le.s32.totalorder 1, %s9
    %p112 = scmp.lt.s32.totalorder %s9, 3
    %p113 = pnand %p111, %p112
    %p114 = pneg %p113
    // Predicated region
    $region9: #{bottleneck_forward.5} parent=5 // pred_check
      _
    $region10: #{bottleneck_forward.5} parent=5 // pred_check_branch
      %116 = sbr.rel (%p113) target = $region12
    $region11: #{bottleneck_forward.5} parent=5 // pred_region
      %s117 = ssub.s32 %s9, 1
      // Predicated region
      $region13: #{bottleneck_forward.5} parent=11 // pred_check
        %p118 = pneg %p56
      $region14: #{bottleneck_forward.5} parent=11 // pred_check_branch
        %120 = sbr.rel (%p118) target = $region16
      $region15: #{bottleneck_forward.5} parent=11 // pred_region
        _
      $region16: #{bottleneck_forward.5} parent=11 // pred_fallthru
        _
      // Predicated region
      $region17: #{bottleneck_forward.5} parent=11 // pred_check
        %p121 = pneg %p77
      $region18: #{bottleneck_forward.5} parent=11 // pred_check_branch
        %123 = sbr.rel (%p121) target = $region20
      $region19: #{bottleneck_forward.5} parent=11 // pred_region
        _
      $region20: #{bottleneck_forward.5} parent=11 // pred_fallthru
        _
    $region12: #{bottleneck_forward.5} parent=5 // pred_fallthru
      _
    %p124 = scmp.lt.s32.totalorder %s9, 2
    // Predicated region
    $region21: #{bottleneck_forward.5} parent=5 // pred_check
      %p125 = pneg %p124
    $region22: #{bottleneck_forward.5} parent=5 // pred_check_branch
      %127 = sbr.rel (%p125) target = $region24
    $region23: #{bottleneck_forward.5} parent=5 // pred_region
      // Predicated region
      $region25: #{bottleneck_forward.5} parent=23 // pred_check
        %p128 = pneg %p29
      $region26: #{bottleneck_forward.5} parent=23 // pred_check_branch
        %130 = sbr.rel (%p128) target = $region28
      $region27: #{bottleneck_forward.5} parent=23 // pred_region
        %p131 = scmp.lt.s32.totalorder %s9, 1
        %s132 = scalar_select %p131, %s9, 1
        %s133 = smul.addr %s132, 16
        %s134 = smul.addr %s133, 4
        %s135 = scalar_lea.vmem %s0, %s134
      $region28: #{bottleneck_forward.5} parent=23 // pred_fallthru
        _
    $region24: #{bottleneck_forward.5} parent=5 // pred_fallthru
      _
    %p136 = scmp.le.s32.totalorder 1, %s9
    %p137 = scmp.lt.s32.totalorder %s9, 3
    %p138 = pnand %p136, %p137
    %p139 = pneg %p138
    // Predicated region
    $region29: #{bottleneck_forward.5} parent=5 // pred_check
      _
    $region30: #{bottleneck_forward.5} parent=5 // pred_check_branch
      %141 = sbr.rel (%p138) target = $region32
    $region31: #{bottleneck_forward.5} parent=5 // pred_region
      %s142 = ssub.s32 %s9, 1
      %p143 = scmp.lt.s32.totalorder %s14, 1
      %s144 = scalar_select %p143, %s14, 1
      %s145 = smul.addr %s144, 16
      %s146 = smul.addr %s145, 4
      %s147 = scalar_lea.vmem %s0, %s146
      %p148 = pneg %p35
      %p149 = pneg %p32
      %p150 = pneg %p56
      %p151 = pneg %p53
      %p152 = pneg %p77
      %p153 = pneg %p74
      %p154 = pneg %p103
      %p155 = pneg %p100
      %p156 = scmp.lt.s32.totalorder %s14, 1
      %s157 = scalar_select %p156, %s14, 1
      %s158 = smul.addr %s157, 3
      %s159 = smul.addr %s158, 4
      %s160 = scalar_lea.vmem %s3, %s159
      %p161 = scmp.lt.s32.totalorder %s14, 1
      %s162 = scalar_select %p161, %s14, 1
      %s163 = smul.addr %s162, 16
      %s164 = smul.addr %s163, 4
      %s165 = scalar_lea.vmem %s0, %s164
      %p166 = scmp.lt.s32.totalorder %s14, 1
      %s167 = scalar_select %p166, %s14, 1
      %s168 = smul.addr %s167, 3
      %s169 = smul.addr %s168, 4
      %s170 = scalar_lea.vmem %s3, %s169
      %v172 = vld [vmem:[%s165] sm:$0xf]
      %v173 = vld [vmem:[%s165 + $0x4] sm:$0xf]
      %v174 = vld [vmem:[%s165 + $0x8] sm:$0x3]
      %v175 = vld [vmem:[%s1] sm:$0xf]
      %v176 = vld [vmem:[%s1 + $0x4] sm:$0xf]
      %v177 = vld [vmem:[%s1 + $0x8] sm:$0xf]
      %v178 = vld [vmem:[%s1 + $0xc] sm:$0xf]
      %v179 = vld [vmem:[%s1 + $0x10] sm:$0xf]
      %v180 = vld [vmem:[%s1 + $0x14] sm:$0xf]
      %v181 = vld [vmem:[%s1 + $0x18] sm:$0xf]
      %v182 = vld [vmem:[%s1 + $0x1c] sm:$0xf]
      %v183 = vld [vmem:[%s1 + $0x20] sm:$0xf]
      %v184 = vld [vmem:[%s1 + $0x24] sm:$0xf]
      %v185 = vld [vmem:[%s1 + $0x28] sm:$0xf]
      %v186 = vld [vmem:[%s1 + $0x2c] sm:$0xf]
      %v187 = vld [vmem:[%s1 + $0x30] sm:$0xf]
      %v188 = vld [vmem:[%s1 + $0x34] sm:$0xf]
      %v189 = vld [vmem:[%s1 + $0x38] sm:$0xf]
      %v190 = vld [vmem:[%s1 + $0x3c] sm:$0xf]
      %v194 = vunpack.c.l.b16 %v172
      %v195 = vunpack.c.l.b16 %v173
      %v196 = vunpack.c.l.b16 %v174
      %v197 = vpack.c.b16 %v195, %v194
      %v198 = vpack.c.b16 %v196, %v196
      %v217 = vunpack.c.l.b16 %v175
      %v218 = vunpack.c.l.b16 %v176
      %v219 = vunpack.c.l.b16 %v177
      %v220 = vunpack.c.l.b16 %v178
      %v221 = vunpack.c.l.b16 %v179
      %v222 = vunpack.c.l.b16 %v180
      %v223 = vunpack.c.l.b16 %v181
      %v224 = vunpack.c.l.b16 %v182
      %v225 = vunpack.c.l.b16 %v183
      %v226 = vunpack.c.l.b16 %v184
      %v227 = vunpack.c.l.b16 %v185
      %v228 = vunpack.c.l.b16 %v186
      %v229 = vunpack.c.l.b16 %v187
      %v230 = vunpack.c.l.b16 %v188
      %v231 = vunpack.c.l.b16 %v189
      %v232 = vunpack.c.l.b16 %v190
      %v233 = vpack.c.b16 %v218, %v217
      %v234 = vpack.c.b16 %v220, %v219
      %v235 = vpack.c.b16 %v222, %v221
      %v236 = vpack.c.b16 %v224, %v223
      %v237 = vpack.c.b16 %v226, %v225
      %v238 = vpack.c.b16 %v228, %v227
      %v239 = vpack.c.b16 %v230, %v229
      %v240 = vpack.c.b16 %v232, %v231
      %249 = vmatprep.subr.bf16.mxu0 0
      %250 = vmatpush1.bf16.msra.mxu0 %v233
      %251 = vmatprep.subr.bf16.mxu0 0
      %252 = vmatpush1.bf16.msra.mxu0 %v234
      %253 = vmatprep.subr.bf16.mxu0 0
      %254 = vmatpush1.bf16.msra.mxu0 %v235
      %255 = vmatprep.subr.bf16.mxu0 0
      %256 = vmatpush1.bf16.msra.mxu0 %v236
      %257 = vmatprep.subr.bf16.mxu0 0
      %258 = vmatpush1.bf16.msra.mxu0 %v237
      %259 = vmatprep.subr.bf16.mxu0 0
      %260 = vmatpush1.bf16.msra.mxu0 %v238
      %261 = vmatprep.subr.bf16.mxu0 0
      %262 = vmatpush1.bf16.msra.mxu0 %v239
      %263 = vmatprep.subr.bf16.mxu0 0
      %264 = vmatpush1.bf16.msra.mxu0 %v240
      %265 = vmatprep.subr.bf16.mxu0 0
      %266 = vmatpush1.bf16.msra.mxu0 0
      %267 = vmatprep.subr.bf16.mxu0 0
      %268 = vmatpush1.bf16.msra.mxu0 0
      %269 = vmatprep.subr.bf16.mxu0 0
      %270 = vmatpush1.bf16.msra.mxu0 0
      %271 = vmatprep.subr.bf16.mxu0 0
      %272 = vmatpush1.bf16.msra.mxu0 0
      %273 = vmatprep.subr.bf16.mxu0 0
      %274 = vmatpush1.bf16.msra.mxu0 0
      %275 = vmatprep.subr.bf16.mxu0 0
      %276 = vmatpush1.bf16.msra.mxu0 0
      %277 = vmatprep.subr.bf16.mxu0 0
      %278 = vmatpush1.bf16.msra.mxu0 0
      %279 = vmatprep.subr.bf16.mxu0 0
      %280 = vmatpush1.bf16.msra.mxu0 0
      %281 = vmatprep.mubr.bf16.mxu0 0
      %282 = vmatmul.mubr.bf16.gmra.mrb[0].mxu0 %v197
      %v283 = vpop.f32.mrb[0].mxu0
      %v284 = vadd.f32 0.0, %v283
      %v285 = vpop.f32.mrb[0].mxu0
      %v286 = vpop.f32.mrb[0].mxu0
      %v287 = vadd.f32 0.0, %v286
      %v288 = vpop.f32.mrb[0].mxu0
      %289 = vmatprep.mubr.bf16.mxu0 0
      %290 = vmatmul.mubr.bf16.gmra.mrb[0].mxu0 %v198
      %v291 = vpop.f32.mrb[0].mxu0
      %v292 = vadd.f32 0.0, %v291
      %v293 = vpop.f32.mrb[0].mxu0
      %v294 = vpop.f32.mrb[0].mxu0
      %v295 = vpop.f32.mrb[0].mxu0
      %296 = vdwg.mxu0
      %297 = vst [vmem:[#allocation2] sm:$0xff] %v284
      %298 = vst [vmem:[#allocation2 + $0x8] sm:$0xff] %v287
      %299 = vst [vmem:[#allocation2 + $0x10] sm:$0xf] %v292
      %s300 = scalar_lea.vmem %s165, 16
      %v301 = vld [vmem:[%s300] sm:$0xf]
      %v302 = vld [vmem:[%s300 + $0x4] sm:$0xf]
      %v303 = vld [vmem:[%s300 + $0x8] sm:$0x3]
      %s304 = scalar_lea.vmem %s1, 64
      %v305 = vld [vmem:[%s304] sm:$0xf]
      %v306 = vld [vmem:[%s304 + $0x4] sm:$0xf]
      %v307 = vld [vmem:[%s304 + $0x8] sm:$0xf]
      %v308 = vld [vmem:[%s304 + $0xc] sm:$0xf]
      %v309 = vld [vmem:[%s304 + $0x10] sm:$0xf]
      %v310 = vld [vmem:[%s304 + $0x14] sm:$0xf]
      %v311 = vld [vmem:[%s304 + $0x18] sm:$0xf]
      %v312 = vld [vmem:[%s304 + $0x1c] sm:$0xf]
      %v313 = vld [vmem:[%s304 + $0x20] sm:$0xf]
      %v314 = vld [vmem:[%s304 + $0x24] sm:$0xf]
      %v315 = vld [vmem:[%s304 + $0x28] sm:$0xf]
      %v316 = vld [vmem:[%s304 + $0x2c] sm:$0xf]
      %v317 = vld [vmem:[%s304 + $0x30] sm:$0xf]
      %v318 = vld [vmem:[%s304 + $0x34] sm:$0xf]
      %v319 = vld [vmem:[%s304 + $0x38] sm:$0xf]
      %v320 = vld [vmem:[%s304 + $0x3c] sm:$0xf]
      %v324 = vunpack.c.l.b16 %v301
      %v325 = vunpack.c.l.b16 %v302
      %v326 = vunpack.c.l.b16 %v303
      %v327 = vpack.c.b16 %v325, %v324
      %v328 = vpack.c.b16 %v326, %v326
      %v347 = vunpack.c.l.b16 %v305
      %v348 = vunpack.c.l.b16 %v306
      %v349 = vunpack.c.l.b16 %v307
      %v350 = vunpack.c.l.b16 %v308
      %v351 = vunpack.c.l.b16 %v309
      %v352 = vunpack.c.l.b16 %v310
      %v353 = vunpack.c.l.b16 %v311
      %v354 = vunpack.c.l.b16 %v312
      %v355 = vunpack.c.l.b16 %v313
      %v356 = vunpack.c.l.b16 %v314
      %v357 = vunpack.c.l.b16 %v315
      %v358 = vunpack.c.l.b16 %v316
      %v359 = vunpack.c.l.b16 %v317
      %v360 = vunpack.c.l.b16 %v318
      %v361 = vunpack.c.l.b16 %v319
      %v362 = vunpack.c.l.b16 %v320
      %v363 = vpack.c.b16 %v348, %v347
      %v364 = vpack.c.b16 %v350, %v349
      %v365 = vpack.c.b16 %v352, %v351
      %v366 = vpack.c.b16 %v354, %v353
      %v367 = vpack.c.b16 %v356, %v355
      %v368 = vpack.c.b16 %v358, %v357
      %v369 = vpack.c.b16 %v360, %v359
      %v370 = vpack.c.b16 %v362, %v361
      %379 = vmatprep.subr.bf16.mxu0 0
      %380 = vmatpush1.bf16.msra.mxu0 %v363
      %381 = vmatprep.subr.bf16.mxu0 0
      %382 = vmatpush1.bf16.msra.mxu0 %v364
      %383 = vmatprep.subr.bf16.mxu0 0
      %384 = vmatpush1.bf16.msra.mxu0 %v365
      %385 = vmatprep.subr.bf16.mxu0 0
      %386 = vmatpush1.bf16.msra.mxu0 %v366
      %387 = vmatprep.subr.bf16.mxu0 0
      %388 = vmatpush1.bf16.msra.mxu0 %v367
      %389 = vmatprep.subr.bf16.mxu0 0
      %390 = vmatpush1.bf16.msra.mxu0 %v368
      %391 = vmatprep.subr.bf16.mxu0 0
      %392 = vmatpush1.bf16.msra.mxu0 %v369
      %393 = vmatprep.subr.bf16.mxu0 0
      %394 = vmatpush1.bf16.msra.mxu0 %v370
      %395 = vmatprep.subr.bf16.mxu0 0
      %396 = vmatpush1.bf16.msra.mxu0 0
      %397 = vmatprep.subr.bf16.mxu0 0
      %398 = vmatpush1.bf16.msra.mxu0 0
      %399 = vmatprep.subr.bf16.mxu0 0
      %400 = vmatpush1.bf16.msra.mxu0 0
      %401 = vmatprep.subr.bf16.mxu0 0
      %402 = vmatpush1.bf16.msra.mxu0 0
      %403 = vmatprep.subr.bf16.mxu0 0
      %404 = vmatpush1.bf16.msra.mxu0 0
      %405 = vmatprep.subr.bf16.mxu0 0
      %406 = vmatpush1.bf16.msra.mxu0 0
      %407 = vmatprep.subr.bf16.mxu0 0
      %408 = vmatpush1.bf16.msra.mxu0 0
      %409 = vmatprep.subr.bf16.mxu0 0
      %410 = vmatpush1.bf16.msra.mxu0 0
      %411 = vmatprep.mubr.bf16.mxu0 0
      %412 = vmatmul.mubr.bf16.gmra.mrb[0].mxu0 %v327
      %v413 = vpop.f32.mrb[0].mxu0
      %v414 = vadd.f32 0.0, %v413
      %v415 = vpop.f32.mrb[0].mxu0
      %v416 = vpop.f32.mrb[0].mxu0
      %v417 = vadd.f32 0.0, %v416
      %v418 = vpop.f32.mrb[0].mxu0
      %419 = vmatprep.mubr.bf16.mxu0 0
      %420 = vmatmul.mubr.bf16.gmra.mrb[0].mxu0 %v328
      %v421 = vpop.f32.mrb[0].mxu0
      %v422 = vadd.f32 0.0, %v421
      %v423 = vpop.f32.mrb[0].mxu0
      %v424 = vpop.f32.mrb[0].mxu0
      %v425 = vpop.f32.mrb[0].mxu0
      %426 = vdwg.mxu0
      %v427 = vld [vmem:[#allocation2] sm:$0xff]
      %v428 = vld [vmem:[#allocation2 + $0x8] sm:$0xff]
      %v429 = vld [vmem:[#allocation2 + $0x10] sm:$0xf]
      %v430 = vadd.f32 %v427, %v414
      %v431 = vadd.f32 %v428, %v417
      %v432 = vadd.f32 %v429, %v422
      %433 = vst [vmem:[#allocation2] sm:$0xff] %v430
      %434 = vst [vmem:[#allocation2 + $0x8] sm:$0xff] %v431
      %435 = vst [vmem:[#allocation2 + $0x10] sm:$0xf] %v432
      %v436 = vld [vmem:[%s165] sm:$0xf]
      %v437 = vld [vmem:[%s165 + $0x4] sm:$0xf]
      %v438 = vld [vmem:[%s165 + $0x8] sm:$0x7]
      %s439 = scalar_lea.vmem %s1, 128
      %v440 = vld [vmem:[%s439] sm:$0xf]
      %v441 = vld [vmem:[%s439 + $0x4] sm:$0xf]
      %v442 = vld [vmem:[%s439 + $0x8] sm:$0xf]
      %v443 = vld [vmem:[%s439 + $0xc] sm:$0xf]
      %v444 = vld [vmem:[%s439 + $0x10] sm:$0xf]
      %v445 = vld [vmem:[%s439 + $0x14] sm:$0xf]
      %v446 = vld [vmem:[%s439 + $0x18] sm:$0xf]
      %v447 = vld [vmem:[%s439 + $0x1c] sm:$0xf]
      %v448 = vld [vmem:[%s439 + $0x20] sm:$0xf]
      %v449 = vld [vmem:[%s439 + $0x24] sm:$0xf]
      %v450 = vld [vmem:[%s439 + $0x28] sm:$0xf]
      %v451 = vld [vmem:[%s439 + $0x2c] sm:$0xf]
      %v452 = vld [vmem:[%s439 + $0x30] sm:$0xf]
      %v453 = vld [vmem:[%s439 + $0x34] sm:$0xf]
      %v454 = vld [vmem:[%s439 + $0x38] sm:$0xf]
      %v455 = vld [vmem:[%s439 + $0x3c] sm:$0xf]
      %v459 = vunpack.c.l.b16 %v436
      %v460 = vunpack.c.l.b16 %v437
      %v461 = vunpack.c.l.b16 %v438
      %v462 = vpack.c.b16 %v460, %v459
      %v463 = vpack.c.b16 %v461, %v461
      %vm464 = vsmask.f32 7424
      %v466 = vshrl.u32 %v462, 16
      %v468 = vshll.u32 %v462, 16
      %v470 = vrot.slane %v468, 1
      %v471 = vor.u32 %v466, %v470
      %v473 = vshll.u32 %v463, 16
      %v475 = vrot.slane %v473, 1
      %v476 = vsel %vm464, %v471, %v475
      %v477 = vshrl.u32 %v463, 16
      %v479 = vor.u32 %v477, %v475
      %v498 = vunpack.c.l.b16 %v440
      %v499 = vunpack.c.l.b16 %v441
      %v500 = vunpack.c.l.b16 %v442
      %v501 = vunpack.c.l.b16 %v443
      %v502 = vunpack.c.l.b16 %v444
      %v503 = vunpack.c.l.b16 %v445
      %v504 = vunpack.c.l.b16 %v446
      %v505 = vunpack.c.l.b16 %v447
      %v506 = vunpack.c.l.b16 %v448
      %v507 = vunpack.c.l.b16 %v449
      %v508 = vunpack.c.l.b16 %v450
      %v509 = vunpack.c.l.b16 %v451
      %v510 = vunpack.c.l.b16 %v452
      %v511 = vunpack.c.l.b16 %v453
      %v512 = vunpack.c.l.b16 %v454
      %v513 = vunpack.c.l.b16 %v455
      %v514 = vpack.c.b16 %v499, %v498
      %v515 = vpack.c.b16 %v501, %v500
      %v516 = vpack.c.b16 %v503, %v502
      %v517 = vpack.c.b16 %v505, %v504
      %v518 = vpack.c.b16 %v507, %v506
      %v519 = vpack.c.b16 %v509, %v508
      %v520 = vpack.c.b16 %v511, %v510
      %v521 = vpack.c.b16 %v513, %v512
      %530 = vmatprep.subr.bf16.mxu0 0
      %531 = vmatpush1.bf16.msra.mxu0 %v514
      %532 = vmatprep.subr.bf16.mxu0 0
      %533 = vmatpush1.bf16.msra.mxu0 %v515
      %534 = vmatprep.subr.bf16.mxu0 0
      %535 = vmatpush1.bf16.msra.mxu0 %v516
      %536 = vmatprep.subr.bf16.mxu0 0
      %537 = vmatpush1.bf16.msra.mxu0 %v517
      %538 = vmatprep.subr.bf16.mxu0 0
      %539 = vmatpush1.bf16.msra.mxu0 %v518
      %540 = vmatprep.subr.bf16.mxu0 0
      %541 = vmatpush1.bf16.msra.mxu0 %v519
      %542 = vmatprep.subr.bf16.mxu0 0
      %543 = vmatpush1.bf16.msra.mxu0 %v520
      %544 = vmatprep.subr.bf16.mxu0 0
      %545 = vmatpush1.bf16.msra.mxu0 %v521
      %546 = vmatprep.subr.bf16.mxu0 0
      %547 = vmatpush1.bf16.msra.mxu0 0
      %548 = vmatprep.subr.bf16.mxu0 0
      %549 = vmatpush1.bf16.msra.mxu0 0
      %550 = vmatprep.subr.bf16.mxu0 0
      %551 = vmatpush1.bf16.msra.mxu0 0
      %552 = vmatprep.subr.bf16.mxu0 0
      %553 = vmatpush1.bf16.msra.mxu0 0
      %554 = vmatprep.subr.bf16.mxu0 0
      %555 = vmatpush1.bf16.msra.mxu0 0
      %556 = vmatprep.subr.bf16.mxu0 0
      %557 = vmatpush1.bf16.msra.mxu0 0
      %558 = vmatprep.subr.bf16.mxu0 0
      %559 = vmatpush1.bf16.msra.mxu0 0
      %560 = vmatprep.subr.bf16.mxu0 0
      %561 = vmatpush1.bf16.msra.mxu0 0
      %562 = vmatprep.mubr.bf16.mxu0 0
      %563 = vmatmul.mubr.bf16.gmra.mrb[0].mxu0 %v476
      %v564 = vpop.f32.mrb[0].mxu0
      %v565 = vadd.f32 0.0, %v564
      %v566 = vpop.f32.mrb[0].mxu0
      %v567 = vpop.f32.mrb[0].mxu0
      %v568 = vadd.f32 0.0, %v567
      %v569 = vpop.f32.mrb[0].mxu0
      %570 = vmatprep.mubr.bf16.mxu0 0
      %571 = vmatmul.mubr.bf16.gmra.mrb[0].mxu0 %v479
      %v572 = vpop.f32.mrb[0].mxu0
      %v573 = vadd.f32 0.0, %v572
      %v574 = vpop.f32.mrb[0].mxu0
      %v575 = vpop.f32.mrb[0].mxu0
      %v576 = vpop.f32.mrb[0].mxu0
      %577 = vdwg.mxu0
      %v578 = vld [vmem:[#allocation2] sm:$0xff]
      %v579 = vld [vmem:[#allocation2 + $0x8] sm:$0xff]
      %v580 = vld [vmem:[#allocation2 + $0x10] sm:$0xf]
      %v581 = vadd.f32 %v578, %v565
      %v582 = vadd.f32 %v579, %v568
      %v583 = vadd.f32 %v580, %v573
      %584 = vst [vmem:[#allocation2] sm:$0xff] %v581
      %585 = vst [vmem:[#allocation2 + $0x8] sm:$0xff] %v582
      %586 = vst [vmem:[#allocation2 + $0x10] sm:$0xf] %v583
      %s587 = scalar_lea.vmem %s165, 32
      %v588 = vld [vmem:[%s587] sm:$0xf]
      %v589 = vld [vmem:[%s587 + $0x4] sm:$0xf]
      %v590 = vld [vmem:[%s587 + $0x8] sm:$0x3]
      %s591 = scalar_lea.vmem %s1, 192
      %v592 = vld [vmem:[%s591] sm:$0xf]
      %v593 = vld [vmem:[%s591 + $0x4] sm:$0xf]
      %v594 = vld [vmem:[%s591 + $0x8] sm:$0xf]
      %v595 = vld [vmem:[%s591 + $0xc] sm:$0xf]
      %v596 = vld [vmem:[%s591 + $0x10] sm:$0xf]
      %v597 = vld [vmem:[%s591 + $0x14] sm:$0xf]
      %v598 = vld [vmem:[%s591 + $0x18] sm:$0xf]
      %v599 = vld [vmem:[%s591 + $0x1c] sm:$0xf]
      %v600 = vld [vmem:[%s591 + $0x20] sm:$0xf]
      %v601 = vld [vmem:[%s591 + $0x24] sm:$0xf]
      %v602 = vld [vmem:[%s591 + $0x28] sm:$0xf]
      %v603 = vld [vmem:[%s591 + $0x2c] sm:$0xf]
      %v604 = vld [vmem:[%s591 + $0x30] sm:$0xf]
      %v605 = vld [vmem:[%s591 + $0x34] sm:$0xf]
      %v606 = vld [vmem:[%s591 + $0x38] sm:$0xf]
      %v607 = vld [vmem:[%s591 + $0x3c] sm:$0xf]
      %v611 = vunpack.c.l.b16 %v588
      %v612 = vunpack.c.l.b16 %v589
      %v613 = vunpack.c.l.b16 %v590
      %v614 = vpack.c.b16 %v612, %v611
      %v615 = vpack.c.b16 %v613, %v613
      %v634 = vunpack.c.l.b16 %v592
      %v635 = vunpack.c.l.b16 %v593
      %v636 = vunpack.c.l.b16 %v594
      %v637 = vunpack.c.l.b16 %v595
      %v638 = vunpack.c.l.b16 %v596
      %v639 = vunpack.c.l.b16 %v597
      %v640 = vunpack.c.l.b16 %v598
      %v641 = vunpack.c.l.b16 %v599
      %v642 = vunpack.c.l.b16 %v600
      %v643 = vunpack.c.l.b16 %v601
      %v644 = vunpack.c.l.b16 %v602
      %v645 = vunpack.c.l.b16 %v603
      %v646 = vunpack.c.l.b16 %v604
      %v647 = vunpack.c.l.b16 %v605
      %v648 = vunpack.c.l.b16 %v606
      %v649 = vunpack.c.l.b16 %v607
      %v650 = vpack.c.b16 %v635, %v634
      %v651 = vpack.c.b16 %v637, %v636
      %v652 = vpack.c.b16 %v639, %v638
      %v653 = vpack.c.b16 %v641, %v640
      %v654 = vpack.c.b16 %v643, %v642
      %v655 = vpack.c.b16 %v645, %v644
      %v656 = vpack.c.b16 %v647, %v646
      %v657 = vpack.c.b16 %v649, %v648
      %666 = vmatprep.subr.bf16.mxu0 0
      %667 = vmatpush1.bf16.msra.mxu0 %v650
      %668 = vmatprep.subr.bf16.mxu0 0
      %669 = vmatpush1.bf16.msra.mxu0 %v651
      %670 = vmatprep.subr.bf16.mxu0 0
      %671 = vmatpush1.bf16.msra.mxu0 %v652
      %672 = vmatprep.subr.bf16.mxu0 0
      %673 = vmatpush1.bf16.msra.mxu0 %v653
      %674 = vmatprep.subr.bf16.mxu0 0
      %675 = vmatpush1.bf16.msra.mxu0 %v654
      %676 = vmatprep.subr.bf16.mxu0 0
      %677 = vmatpush1.bf16.msra.mxu0 %v655
      %678 = vmatprep.subr.bf16.mxu0 0
      %679 = vmatpush1.bf16.msra.mxu0 %v656
      %680 = vmatprep.subr.bf16.mxu0 0
      %681 = vmatpush1.bf16.msra.mxu0 %v657
      %682 = vmatprep.subr.bf16.mxu0 0
      %683 = vmatpush1.bf16.msra.mxu0 0
      %684 = vmatprep.subr.bf16.mxu0 0
      %685 = vmatpush1.bf16.msra.mxu0 0
      %686 = vmatprep.subr.bf16.mxu0 0
      %687 = vmatpush1.bf16.msra.mxu0 0
      %688 = vmatprep.subr.bf16.mxu0 0
      %689 = vmatpush1.bf16.msra.mxu0 0
      %690 = vmatprep.subr.bf16.mxu0 0
      %691 = vmatpush1.bf16.msra.mxu0 0
      %692 = vmatprep.subr.bf16.mxu0 0
      %693 = vmatpush1.bf16.msra.mxu0 0
      %694 = vmatprep.subr.bf16.mxu0 0
      %695 = vmatpush1.bf16.msra.mxu0 0
      %696 = vmatprep.subr.bf16.mxu0 0
      %697 = vmatpush1.bf16.msra.mxu0 0
      %698 = vmatprep.mubr.bf16.mxu0 0
      %699 = vmatmul.mubr.bf16.gmra.mrb[0].mxu0 %v614
      %v700 = vpop.f32.mrb[0].mxu0
      %v701 = vadd.f32 0.0, %v700
      %v702 = vpop.f32.mrb[0].mxu0
      %v703 = vpop.f32.mrb[0].mxu0
      %v704 = vadd.f32 0.0, %v703
      %v705 = vpop.f32.mrb[0].mxu0
      %706 = vmatprep.mubr.bf16.mxu0 0
      %707 = vmatmul.mubr.bf16.gmra.mrb[0].mxu0 %v615
      %v708 = vpop.f32.mrb[0].mxu0
      %v709 = vadd.f32 0.0, %v708
      %v710 = vpop.f32.mrb[0].mxu0
      %v711 = vpop.f32.mrb[0].mxu0
      %v712 = vpop.f32.mrb[0].mxu0
      %713 = vdwg.mxu0
      %v714 = vld [vmem:[#allocation2] sm:$0xff]
      %v715 = vld [vmem:[#allocation2 + $0x8] sm:$0xff]
      %v716 = vld [vmem:[#allocation2 + $0x10] sm:$0xf]
      %v717 = vadd.f32 %v714, %v701
      %v718 = vadd.f32 %v715, %v704
      %v719 = vadd.f32 %v716, %v709
      %720 = vst [vmem:[#allocation2] sm:$0xff] %v717
      %721 = vst [vmem:[#allocation2 + $0x8] sm:$0xff] %v718
      %722 = vst [vmem:[#allocation2 + $0x10] sm:$0xf] %v719
      %s723 = scalar_lea.vmem %s165, 48
      %v724 = vld [vmem:[%s723] sm:$0xf]
      %v725 = vld [vmem:[%s723 + $0x4] sm:$0xf]
      %v726 = vld [vmem:[%s723 + $0x8] sm:$0x3]
      %s727 = scalar_lea.vmem %s1, 256
      %v728 = vld [vmem:[%s727] sm:$0xf]
      %v729 = vld [vmem:[%s727 + $0x4] sm:$0xf]
      %v730 = vld [vmem:[%s727 + $0x8] sm:$0xf]
      %v731 = vld [vmem:[%s727 + $0xc] sm:$0xf]
      %v732 = vld [vmem:[%s727 + $0x10] sm:$0xf]
      %v733 = vld [vmem:[%s727 + $0x14] sm:$0xf]
      %v734 = vld [vmem:[%s727 + $0x18] sm:$0xf]
      %v735 = vld [vmem:[%s727 + $0x1c] sm:$0xf]
      %v736 = vld [vmem:[%s727 + $0x20] sm:$0xf]
      %v737 = vld [vmem:[%s727 + $0x24] sm:$0xf]
      %v738 = vld [vmem:[%s727 + $0x28] sm:$0xf]
      %v739 = vld [vmem:[%s727 + $0x2c] sm:$0xf]
      %v740 = vld [vmem:[%s727 + $0x30] sm:$0xf]
      %v741 = vld [vmem:[%s727 + $0x34] sm:$0xf]
      %v742 = vld [vmem:[%s727 + $0x38] sm:$0xf]
      %v743 = vld [vmem:[%s727 + $0x3c] sm:$0xf]
      %v747 = vunpack.c.l.b16 %v724
      %v748 = vunpack.c.l.b16 %v725
      %v749 = vunpack.c.l.b16 %v726
      %v750 = vpack.c.b16 %v748, %v747
      %v751 = vpack.c.b16 %v749, %v749
      %v770 = vunpack.c.l.b16 %v728
      %v771 = vunpack.c.l.b16 %v729
      %v772 = vunpack.c.l.b16 %v730
      %v773 = vunpack.c.l.b16 %v731
      %v774 = vunpack.c.l.b16 %v732
      %v775 = vunpack.c.l.b16 %v733
      %v776 = vunpack.c.l.b16 %v734
      %v777 = vunpack.c.l.b16 %v735
      %v778 = vunpack.c.l.b16 %v736
      %v779 = vunpack.c.l.b16 %v737
      %v780 = vunpack.c.l.b16 %v738
      %v781 = vunpack.c.l.b16 %v739
      %v782 = vunpack.c.l.b16 %v740
      %v783 = vunpack.c.l.b16 %v741
      %v784 = vunpack.c.l.b16 %v742
      %v785 = vunpack.c.l.b16 %v743
      %v786 = vpack.c.b16 %v771, %v770
      %v787 = vpack.c.b16 %v773, %v772
      %v788 = vpack.c.b16 %v775, %v774
      %v789 = vpack.c.b16 %v777, %v776
      %v790 = vpack.c.b16 %v779, %v778
      %v791 = vpack.c.b16 %v781, %v780
      %v792 = vpack.c.b16 %v783, %v782
      %v793 = vpack.c.b16 %v785, %v784
      %802 = vmatprep.subr.bf16.mxu0 0
      %803 = vmatpush1.bf16.msra.mxu0 %v786
      %804 = vmatprep.subr.bf16.mxu0 0
      %805 = vmatpush1.bf16.msra.mxu0 %v787
      %806 = vmatprep.subr.bf16.mxu0 0
      %807 = vmatpush1.bf16.msra.mxu0 %v788
      %808 = vmatprep.subr.bf16.mxu0 0
      %809 = vmatpush1.bf16.msra.mxu0 %v789
      %810 = vmatprep.subr.bf16.mxu0 0
      %811 = vmatpush1.bf16.msra.mxu0 %v790
      %812 = vmatprep.subr.bf16.mxu0 0
      %813 = vmatpush1.bf16.msra.mxu0 %v791
      %814 = vmatprep.subr.bf16.mxu0 0
      %815 = vmatpush1.bf16.msra.mxu0 %v792
      %816 = vmatprep.subr.bf16.mxu0 0
      %817 = vmatpush1.bf16.msra.mxu0 %v793
      %818 = vmatprep.subr.bf16.mxu0 0
      %819 = vmatpush1.bf16.msra.mxu0 0
      %820 = vmatprep.subr.bf16.mxu0 0
      %821 = vmatpush1.bf16.msra.mxu0 0
      %822 = vmatprep.subr.bf16.mxu0 0
      %823 = vmatpush1.bf16.msra.mxu0 0
      %824 = vmatprep.subr.bf16.mxu0 0
      %825 = vmatpush1.bf16.msra.mxu0 0
      %826 = vmatprep.subr.bf16.mxu0 0
      %827 = vmatpush1.bf16.msra.mxu0 0
      %828 = vmatprep.subr.bf16.mxu0 0
      %829 = vmatpush1.bf16.msra.mxu0 0
      %830 = vmatprep.subr.bf16.mxu0 0
      %831 = vmatpush1.bf16.msra.mxu0 0
      %832 = vmatprep.subr.bf16.mxu0 0
      %833 = vmatpush1.bf16.msra.mxu0 0
      %834 = vmatprep.mubr.bf16.mxu0 0
      %835 = vmatmul.mubr.bf16.gmra.mrb[0].mxu0 %v750
      %v836 = vpop.f32.mrb[0].mxu0
      %v837 = vadd.f32 0.0, %v836
      %v838 = vpop.f32.mrb[0].mxu0
      %v839 = vpop.f32.mrb[0].mxu0
      %v840 = vadd.f32 0.0, %v839
      %v841 = vpop.f32.mrb[0].mxu0
      %842 = vmatprep.mubr.bf16.mxu0 0
      %843 = vmatmul.mubr.bf16.gmra.mrb[0].mxu0 %v751
      %v844 = vpop.f32.mrb[0].mxu0
      %v845 = vadd.f32 0.0, %v844
      %v846 = vpop.f32.mrb[0].mxu0
      %v847 = vpop.f32.mrb[0].mxu0
      %v848 = vpop.f32.mrb[0].mxu0
      %849 = vdwg.mxu0
      %v850 = vld [vmem:[#allocation2] sm:$0xff]
      %v851 = vld [vmem:[#allocation2 + $0x8] sm:$0xff]
      %v852 = vld [vmem:[#allocation2 + $0x10] sm:$0xf]
      %v853 = vadd.f32 %v850, %v837
      %v854 = vadd.f32 %v851, %v840
      %v855 = vadd.f32 %v852, %v845
      %856 = vst [vmem:[#allocation2] sm:$0xff] %v853
      %857 = vst [vmem:[#allocation2 + $0x8] sm:$0xff] %v854
      %858 = vst [vmem:[#allocation2 + $0x10] sm:$0xf] %v855
      %v859 = vld [vmem:[%s587] sm:$0xf]
      %v860 = vld [vmem:[%s587 + $0x4] sm:$0xf]
      %v861 = vld [vmem:[%s587 + $0x8] sm:$0x7]
      %s862 = scalar_lea.vmem %s1, 320
      %v863 = vld [vmem:[%s862] sm:$0xf]
      %v864 = vld [vmem:[%s862 + $0x4] sm:$0xf]
      %v865 = vld [vmem:[%s862 + $0x8] sm:$0xf]
      %v866 = vld [vmem:[%s862 + $0xc] sm:$0xf]
      %v867 = vld [vmem:[%s862 + $0x10] sm:$0xf]
      %v868 = vld [vmem:[%s862 + $0x14] sm:$0xf]
      %v869 = vld [vmem:[%s862 + $0x18] sm:$0xf]
      %v870 = vld [vmem:[%s862 + $0x1c] sm:$0xf]
      %v871 = vld [vmem:[%s862 + $0x20] sm:$0xf]
      %v872 = vld [vmem:[%s862 + $0x24] sm:$0xf]
      %v873 = vld [vmem:[%s862 + $0x28] sm:$0xf]
      %v874 = vld [vmem:[%s862 + $0x2c] sm:$0xf]
      %v875 = vld [vmem:[%s862 + $0x30] sm:$0xf]
      %v876 = vld [vmem:[%s862 + $0x34] sm:$0xf]
      %v877 = vld [vmem:[%s862 + $0x38] sm:$0xf]
      %v878 = vld [vmem:[%s862 + $0x3c] sm:$0xf]
      %v882 = vunpack.c.l.b16 %v859
      %v883 = vunpack.c.l.b16 %v860
      %v884 = vunpack.c.l.b16 %v861
      %v885 = vpack.c.b16 %v883, %v882
      %v886 = vpack.c.b16 %v884, %v884
      %v888 = vshrl.u32 %v885, 16
      %v890 = vshll.u32 %v885, 16
      %v892 = vrot.slane %v890, 1
      %v893 = vor.u32 %v888, %v892
      %v895 = vshll.u32 %v886, 16
      %v897 = vrot.slane %v895, 1
      %v898 = vsel %vm464, %v893, %v897
      %v899 = vshrl.u32 %v886, 16
      %v901 = vor.u32 %v899, %v897
      %v920 = vunpack.c.l.b16 %v863
      %v921 = vunpack.c.l.b16 %v864
      %v922 = vunpack.c.l.b16 %v865
      %v923 = vunpack.c.l.b16 %v866
      %v924 = vunpack.c.l.b16 %v867
      %v925 = vunpack.c.l.b16 %v868
      %v926 = vunpack.c.l.b16 %v869
      %v927 = vunpack.c.l.b16 %v870
      %v928 = vunpack.c.l.b16 %v871
      %v929 = vunpack.c.l.b16 %v872
      %v930 = vunpack.c.l.b16 %v873
      %v931 = vunpack.c.l.b16 %v874
      %v932 = vunpack.c.l.b16 %v875
      %v933 = vunpack.c.l.b16 %v876
      %v934 = vunpack.c.l.b16 %v877
      %v935 = vunpack.c.l.b16 %v878
      %v936 = vpack.c.b16 %v921, %v920
      %v937 = vpack.c.b16 %v923, %v922
      %v938 = vpack.c.b16 %v925, %v924
      %v939 = vpack.c.b16 %v927, %v926
      %v940 = vpack.c.b16 %v929, %v928
      %v941 = vpack.c.b16 %v931, %v930
      %v942 = vpack.c.b16 %v933, %v932
      %v943 = vpack.c.b16 %v935, %v934
      %952 = vmatprep.subr.bf16.mxu0 0
      %953 = vmatpush1.bf16.msra.mxu0 %v936
      %954 = vmatprep.subr.bf16.mxu0 0
      %955 = vmatpush1.bf16.msra.mxu0 %v937
      %956 = vmatprep.subr.bf16.mxu0 0
      %957 = vmatpush1.bf16.msra.mxu0 %v938
      %958 = vmatprep.subr.bf16.mxu0 0
      %959 = vmatpush1.bf16.msra.mxu0 %v939
      %960 = vmatprep.subr.bf16.mxu0 0
      %961 = vmatpush1.bf16.msra.mxu0 %v940
      %962 = vmatprep.subr.bf16.mxu0 0
      %963 = vmatpush1.bf16.msra.mxu0 %v941
      %964 = vmatprep.subr.bf16.mxu0 0
      %965 = vmatpush1.bf16.msra.mxu0 %v942
      %966 = vmatprep.subr.bf16.mxu0 0
      %967 = vmatpush1.bf16.msra.mxu0 %v943
      %968 = vmatprep.subr.bf16.mxu0 0
      %969 = vmatpush1.bf16.msra.mxu0 0
      %970 = vmatprep.subr.bf16.mxu0 0
      %971 = vmatpush1.bf16.msra.mxu0 0
      %972 = vmatprep.subr.bf16.mxu0 0
      %973 = vmatpush1.bf16.msra.mxu0 0
      %974 = vmatprep.subr.bf16.mxu0 0
      %975 = vmatpush1.bf16.msra.mxu0 0
      %976 = vmatprep.subr.bf16.mxu0 0
      %977 = vmatpush1.bf16.msra.mxu0 0
      %978 = vmatprep.subr.bf16.mxu0 0
      %979 = vmatpush1.bf16.msra.mxu0 0
      %980 = vmatprep.subr.bf16.mxu0 0
      %981 = vmatpush1.bf16.msra.mxu0 0
      %982 = vmatprep.subr.bf16.mxu0 0
      %983 = vmatpush1.bf16.msra.mxu0 0
      %984 = vmatprep.mubr.bf16.mxu0 0
      %985 = vmatmul.mubr.bf16.gmra.mrb[0].mxu0 %v898
      %v986 = vpop.f32.mrb[0].mxu0
      %v987 = vadd.f32 0.0, %v986
      %v988 = vpop.f32.mrb[0].mxu0
      %v989 = vpop.f32.mrb[0].mxu0
      %v990 = vadd.f32 0.0, %v989
      %v991 = vpop.f32.mrb[0].mxu0
      %992 = vmatprep.mubr.bf16.mxu0 0
      %993 = vmatmul.mubr.bf16.gmra.mrb[0].mxu0 %v901
      %v994 = vpop.f32.mrb[0].mxu0
      %v995 = vadd.f32 0.0, %v994
      %v996 = vpop.f32.mrb[0].mxu0
      %v997 = vpop.f32.mrb[0].mxu0
      %v998 = vpop.f32.mrb[0].mxu0
      %999 = vdwg.mxu0
      %v1000 = vld [vmem:[#allocation2] sm:$0xff]
      %v1001 = vld [vmem:[#allocation2 + $0x8] sm:$0xff]
      %v1002 = vld [vmem:[#allocation2 + $0x10] sm:$0xf]
      %v1003 = vadd.f32 %v1000, %v987
      %v1004 = vadd.f32 %v1001, %v990
      %v1005 = vadd.f32 %v1002, %v995
      %1006 = vst [vmem:[#allocation2] sm:$0xff] %v1003
      %1007 = vst [vmem:[#allocation2 + $0x8] sm:$0xff] %v1004
      %1008 = vst [vmem:[#allocation2 + $0x10] sm:$0xf] %v1005
      %v1009 = vld [vmem:[%s165] sm:$0xc]
      %v1010 = vld [vmem:[%s165 + $0x4] sm:$0xf]
      %v1011 = vld [vmem:[%s165 + $0x8] sm:$0xf]
      %v1012 = vld [vmem:[%s165 + $0xc] sm:$0x1]
      %s1013 = scalar_lea.vmem %s1, 384
      %v1014 = vld [vmem:[%s1013] sm:$0xf]
      %v1015 = vld [vmem:[%s1013 + $0x4] sm:$0xf]
      %v1016 = vld [vmem:[%s1013 + $0x8] sm:$0xf]
      %v1017 = vld [vmem:[%s1013 + $0xc] sm:$0xf]
      %v1018 = vld [vmem:[%s1013 + $0x10] sm:$0xf]
      %v1019 = vld [vmem:[%s1013 + $0x14] sm:$0xf]
      %v1020 = vld [vmem:[%s1013 + $0x18] sm:$0xf]
      %v1021 = vld [vmem:[%s1013 + $0x1c] sm:$0xf]
      %v1022 = vld [vmem:[%s1013 + $0x20] sm:$0xf]
      %v1023 = vld [vmem:[%s1013 + $0x24] sm:$0xf]
      %v1024 = vld [vmem:[%s1013 + $0x28] sm:$0xf]
      %v1025 = vld [vmem:[%s1013 + $0x2c] sm:$0xf]
      %v1026 = vld [vmem:[%s1013 + $0x30] sm:$0xf]
      %v1027 = vld [vmem:[%s1013 + $0x34] sm:$0xf]
      %v1028 = vld [vmem:[%s1013 + $0x38] sm:$0xf]
      %v1029 = vld [vmem:[%s1013 + $0x3c] sm:$0xf]
      %v1034 = vunpack.c.l.b16 %v1009
      %v1035 = vunpack.c.l.b16 %v1010
      %v1036 = vunpack.c.l.b16 %v1011
      %v1037 = vunpack.c.l.b16 %v1012
      %v1038 = vpack.c.b16 %v1035, %v1034
      %v1039 = vpack.c.b16 %v1037, %v1036
      %vm1040 = vsmask.f32 5376
      %v1042 = vshrl.u32 %v1038, 16
      %v1044 = vrot.slane %v1042, 2
      %v1045 = vshll.u32 %v1038, 16
      %v1047 = vrot.slane %v1045, 3
      %v1048 = vor.u32 %v1044, %v1047
      %v1050 = vshrl.u32 %v1039, 16
      %v1052 = vrot.slane %v1050, 2
      %v1053 = vshll.u32 %v1039, 16
      %v1055 = vrot.slane %v1053, 3
      %v1056 = vor.u32 %v1052, %v1055
      %v1057 = vsel %vm1040, %v1048, %v1056
      %v1076 = vunpack.c.l.b16 %v1014
      %v1077 = vunpack.c.l.b16 %v1015
      %v1078 = vunpack.c.l.b16 %v1016
      %v1079 = vunpack.c.l.b16 %v1017
      %v1080 = vunpack.c.l.b16 %v1018
      %v1081 = vunpack.c.l.b16 %v1019
      %v1082 = vunpack.c.l.b16 %v1020
      %v1083 = vunpack.c.l.b16 %v1021
      %v1084 = vunpack.c.l.b16 %v1022
      %v1085 = vunpack.c.l.b16 %v1023
      %v1086 = vunpack.c.l.b16 %v1024
      %v1087 = vunpack.c.l.b16 %v1025
      %v1088 = vunpack.c.l.b16 %v1026
      %v1089 = vunpack.c.l.b16 %v1027
      %v1090 = vunpack.c.l.b16 %v1028
      %v1091 = vunpack.c.l.b16 %v1029
      %v1092 = vpack.c.b16 %v1077, %v1076
      %v1093 = vpack.c.b16 %v1079, %v1078
      %v1094 = vpack.c.b16 %v1081, %v1080
      %v1095 = vpack.c.b16 %v1083, %v1082
      %v1096 = vpack.c.b16 %v1085, %v1084
      %v1097 = vpack.c.b16 %v1087, %v1086
      %v1098 = vpack.c.b16 %v1089, %v1088
      %v1099 = vpack.c.b16 %v1091, %v1090
      %1108 = vmatprep.subr.bf16.mxu0 0
      %1109 = vmatpush1.bf16.msra.mxu0 %v1092
      %1110 = vmatprep.subr.bf16.mxu0 0
      %1111 = vmatpush1.bf16.msra.mxu0 %v1093
      %1112 = vmatprep.subr.bf16.mxu0 0
      %1113 = vmatpush1.bf16.msra.mxu0 %v1094
      %1114 = vmatprep.subr.bf16.mxu0 0
      %1115 = vmatpush1.bf16.msra.mxu0 %v1095
      %1116 = vmatprep.subr.bf16.mxu0 0
      %1117 = vmatpush1.bf16.msra.mxu0 %v1096
      %1118 = vmatprep.subr.bf16.mxu0 0
      %1119 = vmatpush1.bf16.msra.mxu0 %v1097
      %1120 = vmatprep.subr.bf16.mxu0 0
      %1121 = vmatpush1.bf16.msra.mxu0 %v1098
      %1122 = vmatprep.subr.bf16.mxu0 0
      %1123 = vmatpush1.bf16.msra.mxu0 %v1099
      %1124 = vmatprep.subr.bf16.mxu0 0
      %1125 = vmatpush1.bf16.msra.mxu0 0
      %1126 = vmatprep.subr.bf16.mxu0 0
      %1127 = vmatpush1.bf16.msra.mxu0 0
      %1128 = vmatprep.subr.bf16.mxu0 0
      %1129 = vmatpush1.bf16.msra.mxu0 0
      %1130 = vmatprep.subr.bf16.mxu0 0
      %1131 = vmatpush1.bf16.msra.mxu0 0
      %1132 = vmatprep.subr.bf16.mxu0 0
      %1133 = vmatpush1.bf16.msra.mxu0 0
      %1134 = vmatprep.subr.bf16.mxu0 0
      %1135 = vmatpush1.bf16.msra.mxu0 0
      %1136 = vmatprep.subr.bf16.mxu0 0
      %1137 = vmatpush1.bf16.msra.mxu0 0
      %1138 = vmatprep.subr.bf16.mxu0 0
      %1139 = vmatpush1.bf16.msra.mxu0 0
      %1140 = vmatprep.mubr.bf16.mxu0 0
      %1141 = vmatmul.mubr.bf16.gmra.mrb[0].mxu0 %v1057
      %v1142 = vpop.f32.mrb[0].mxu0
      %v1143 = vadd.f32 0.0, %v1142
      %v1144 = vpop.f32.mrb[0].mxu0
      %v1145 = vpop.f32.mrb[0].mxu0
      %v1146 = vadd.f32 0.0, %v1145
      %v1147 = vpop.f32.mrb[0].mxu0
      %1148 = vmatprep.mubr.bf16.mxu0 0
      %1149 = vmatmul.mubr.bf16.gmra.mrb[0].mxu0 %v1056
      %v1150 = vpop.f32.mrb[0].mxu0
      %v1151 = vadd.f32 0.0, %v1150
      %v1152 = vpop.f32.mrb[0].mxu0
      %v1153 = vpop.f32.mrb[0].mxu0
      %v1154 = vpop.f32.mrb[0].mxu0
      %1155 = vdwg.mxu0
      %v1156 = vld [vmem:[#allocation2] sm:$0xff]
      %v1157 = vld [vmem:[#allocation2 + $0x8] sm:$0xff]
      %v1158 = vld [vmem:[#allocation2 + $0x10] sm:$0xf]
      %v1159 = vadd.f32 %v1156, %v1143
      %v1160 = vadd.f32 %v1157, %v1146
      %v1161 = vadd.f32 %v1158, %v1151
      %1162 = vst [vmem:[#allocation2] sm:$0xff] %v1159
      %1163 = vst [vmem:[#allocation2 + $0x8] sm:$0xff] %v1160
      %1164 = vst [vmem:[#allocation2 + $0x10] sm:$0xf] %v1161
      %v1165 = vld [vmem:[%s300] sm:$0xc]
      %v1166 = vld [vmem:[%s300 + $0x4] sm:$0xf]
      %v1167 = vld [vmem:[%s300 + $0x8] sm:$0xf]
      %v1168 = vld [vmem:[%s300 + $0xc] sm:$0x1]
      %s1169 = scalar_lea.vmem %s1, 448
      %v1170 = vld [vmem:[%s1169] sm:$0xf]
      %v1171 = vld [vmem:[%s1169 + $0x4] sm:$0xf]
      %v1172 = vld [vmem:[%s1169 + $0x8] sm:$0xf]
      %v1173 = vld [vmem:[%s1169 + $0xc] sm:$0xf]
      %v1174 = vld [vmem:[%s1169 + $0x10] sm:$0xf]
      %v1175 = vld [vmem:[%s1169 + $0x14] sm:$0xf]
      %v1176 = vld [vmem:[%s1169 + $0x18] sm:$0xf]
      %v1177 = vld [vmem:[%s1169 + $0x1c] sm:$0xf]
      %v1178 = vld [vmem:[%s1169 + $0x20] sm:$0xf]
      %v1179 = vld [vmem:[%s1169 + $0x24] sm:$0xf]
      %v1180 = vld [vmem:[%s1169 + $0x28] sm:$0xf]
      %v1181 = vld [vmem:[%s1169 + $0x2c] sm:$0xf]
      %v1182 = vld [vmem:[%s1169 + $0x30] sm:$0xf]
      %v1183 = vld [vmem:[%s1169 + $0x34] sm:$0xf]
      %v1184 = vld [vmem:[%s1169 + $0x38] sm:$0xf]
      %v1185 = vld [vmem:[%s1169 + $0x3c] sm:$0xf]
      %v1190 = vunpack.c.l.b16 %v1165
      %v1191 = vunpack.c.l.b16 %v1166
      %v1192 = vunpack.c.l.b16 %v1167
      %v1193 = vunpack.c.l.b16 %v1168
      %v1194 = vpack.c.b16 %v1191, %v1190
      %v1195 = vpack.c.b16 %v1193, %v1192
      %v1197 = vshrl.u32 %v1194, 16
      %v1199 = vrot.slane %v1197, 2
      %v1200 = vshll.u32 %v1194, 16
      %v1202 = vrot.slane %v1200, 3
      %v1203 = vor.u32 %v1199, %v1202
      %v1205 = vshrl.u32 %v1195, 16
      %v1207 = vrot.slane %v1205, 2
      %v1208 = vshll.u32 %v1195, 16
      %v1210 = vrot.slane %v1208, 3
      %v1211 = vor.u32 %v1207, %v1210
      %v1212 = vsel %vm1040, %v1203, %v1211
      %v1231 = vunpack.c.l.b16 %v1170
      %v1232 = vunpack.c.l.b16 %v1171
      %v1233 = vunpack.c.l.b16 %v1172
      %v1234 = vunpack.c.l.b16 %v1173
      %v1235 = vunpack.c.l.b16 %v1174
      %v1236 = vunpack.c.l.b16 %v1175
      %v1237 = vunpack.c.l.b16 %v1176
      %v1238 = vunpack.c.l.b16 %v1177
      %v1239 = vunpack.c.l.b16 %v1178
      %v1240 = vunpack.c.l.b16 %v1179
      %v1241 = vunpack.c.l.b16 %v1180
      %v1242 = vunpack.c.l.b16 %v1181
      %v1243 = vunpack.c.l.b16 %v1182
      %v1244 = vunpack.c.l.b16 %v1183
      %v1245 = vunpack.c.l.b16 %v1184
      %v1246 = vunpack.c.l.b16 %v1185
      %v1247 = vpack.c.b16 %v1232, %v1231
      %v1248 = vpack.c.b16 %v1234, %v1233
      %v1249 = vpack.c.b16 %v1236, %v1235
      %v1250 = vpack.c.b16 %v1238, %v1237
      %v1251 = vpack.c.b16 %v1240, %v1239
      %v1252 = vpack.c.b16 %v1242, %v1241
      %v1253 = vpack.c.b16 %v1244, %v1243
      %v1254 = vpack.c.b16 %v1246, %v1245
      %1263 = vmatprep.subr.bf16.mxu0 0
      %1264 = vmatpush1.bf16.msra.mxu0 %v1247
      %1265 = vmatprep.subr.bf16.mxu0 0
      %1266 = vmatpush1.bf16.msra.mxu0 %v1248
      %1267 = vmatprep.subr.bf16.mxu0 0
      %1268 = vmatpush1.bf16.msra.mxu0 %v1249
      %1269 = vmatprep.subr.bf16.mxu0 0
      %1270 = vmatpush1.bf16.msra.mxu0 %v1250
      %1271 = vmatprep.subr.bf16.mxu0 0
      %1272 = vmatpush1.bf16.msra.mxu0 %v1251
      %1273 = vmatprep.subr.bf16.mxu0 0
      %1274 = vmatpush1.bf16.msra.mxu0 %v1252
      %1275 = vmatprep.subr.bf16.mxu0 0
      %1276 = vmatpush1.bf16.msra.mxu0 %v1253
      %1277 = vmatprep.subr.bf16.mxu0 0
      %1278 = vmatpush1.bf16.msra.mxu0 %v1254
      %1279 = vmatprep.subr.bf16.mxu0 0
      %1280 = vmatpush1.bf16.msra.mxu0 0
      %1281 = vmatprep.subr.bf16.mxu0 0
      %1282 = vmatpush1.bf16.msra.mxu0 0
      %1283 = vmatprep.subr.bf16.mxu0 0
      %1284 = vmatpush1.bf16.msra.mxu0 0
      %1285 = vmatprep.subr.bf16.mxu0 0
      %1286 = vmatpush1.bf16.msra.mxu0 0
      %1287 = vmatprep.subr.bf16.mxu0 0
      %1288 = vmatpush1.bf16.msra.mxu0 0
      %1289 = vmatprep.subr.bf16.mxu0 0
      %1290 = vmatpush1.bf16.msra.mxu0 0
      %1291 = vmatprep.subr.bf16.mxu0 0
      %1292 = vmatpush1.bf16.msra.mxu0 0
      %1293 = vmatprep.subr.bf16.mxu0 0
      %1294 = vmatpush1.bf16.msra.mxu0 0
      %1295 = vmatprep.mubr.bf16.mxu0 0
      %1296 = vmatmul.mubr.bf16.gmra.mrb[0].mxu0 %v1212
      %v1297 = vpop.f32.mrb[0].mxu0
      %v1298 = vadd.f32 0.0, %v1297
      %v1299 = vpop.f32.mrb[0].mxu0
      %v1300 = vpop.f32.mrb[0].mxu0
      %v1301 = vadd.f32 0.0, %v1300
      %v1302 = vpop.f32.mrb[0].mxu0
      %1303 = vmatprep.mubr.bf16.mxu0 0
      %1304 = vmatmul.mubr.bf16.gmra.mrb[0].mxu0 %v1211
      %v1305 = vpop.f32.mrb[0].mxu0
      %v1306 = vadd.f32 0.0, %v1305
      %v1307 = vpop.f32.mrb[0].mxu0
      %v1308 = vpop.f32.mrb[0].mxu0
      %v1309 = vpop.f32.mrb[0].mxu0
      %1310 = vdwg.mxu0
      %v1311 = vld [vmem:[#allocation2] sm:$0xff]
      %v1312 = vld [vmem:[#allocation2 + $0x8] sm:$0xff]
      %v1313 = vld [vmem:[#allocation2 + $0x10] sm:$0xf]
      %v1314 = vadd.f32 %v1311, %v1298
      %v1315 = vadd.f32 %v1312, %v1301
      %v1316 = vadd.f32 %v1313, %v1306
      %1317 = vst [vmem:[#allocation2] sm:$0xff] %v1314
      %1318 = vst [vmem:[#allocation2 + $0x8] sm:$0xff] %v1315
      %1319 = vst [vmem:[#allocation2 + $0x10] sm:$0xf] %v1316
      %v1320 = vld [vmem:[%s165] sm:$0x8]
      %v1321 = vld [vmem:[%s165 + $0x4] sm:$0xf]
      %v1322 = vld [vmem:[%s165 + $0x8] sm:$0xf]
      %v1323 = vld [vmem:[%s165 + $0xc] sm:$0x1]
      %s1324 = scalar_lea.vmem %s1, 512
      %v1325 = vld [vmem:[%s1324] sm:$0xf]
      %v1326 = vld [vmem:[%s1324 + $0x4] sm:$0xf]
      %v1327 = vld [vmem:[%s1324 + $0x8] sm:$0xf]
      %v1328 = vld [vmem:[%s1324 + $0xc] sm:$0xf]
      %v1329 = vld [vmem:[%s1324 + $0x10] sm:$0xf]
      %v1330 = vld [vmem:[%s1324 + $0x14] sm:$0xf]
      %v1331 = vld [vmem:[%s1324 + $0x18] sm:$0xf]
      %v1332 = vld [vmem:[%s1324 + $0x1c] sm:$0xf]
      %v1333 = vld [vmem:[%s1324 + $0x20] sm:$0xf]
      %v1334 = vld [vmem:[%s1324 + $0x24] sm:$0xf]
      %v1335 = vld [vmem:[%s1324 + $0x28] sm:$0xf]
      %v1336 = vld [vmem:[%s1324 + $0x2c] sm:$0xf]
      %v1337 = vld [vmem:[%s1324 + $0x30] sm:$0xf]
      %v1338 = vld [vmem:[%s1324 + $0x34] sm:$0xf]
      %v1339 = vld [vmem:[%s1324 + $0x38] sm:$0xf]
      %v1340 = vld [vmem:[%s1324 + $0x3c] sm:$0xf]
      %v1345 = vunpack.c.l.b16 %v1320
      %v1346 = vunpack.c.l.b16 %v1321
      %v1347 = vunpack.c.l.b16 %v1322
      %v1348 = vunpack.c.l.b16 %v1323
      %v1349 = vpack.c.b16 %v1346, %v1345
      %v1350 = vpack.c.b16 %v1348, %v1347
      %vm1351 = vcmask 1044480
      %v1352 = vrot.slane %v1349, 3
      %v1353 = vrot.slane %v1350, 3
      %v1354 = vsel %vm1351, %v1352, %v1353
      %v1373 = vunpack.c.l.b16 %v1325
      %v1374 = vunpack.c.l.b16 %v1326
      %v1375 = vunpack.c.l.b16 %v1327
      %v1376 = vunpack.c.l.b16 %v1328
      %v1377 = vunpack.c.l.b16 %v1329
      %v1378 = vunpack.c.l.b16 %v1330
      %v1379 = vunpack.c.l.b16 %v1331
      %v1380 = vunpack.c.l.b16 %v1332
      %v1381 = vunpack.c.l.b16 %v1333
      %v1382 = vunpack.c.l.b16 %v1334
      %v1383 = vunpack.c.l.b16 %v1335
      %v1384 = vunpack.c.l.b16 %v1336
      %v1385 = vunpack.c.l.b16 %v1337
      %v1386 = vunpack.c.l.b16 %v1338
      %v1387 = vunpack.c.l.b16 %v1339
      %v1388 = vunpack.c.l.b16 %v1340
      %v1389 = vpack.c.b16 %v1374, %v1373
      %v1390 = vpack.c.b16 %v1376, %v1375
      %v1391 = vpack.c.b16 %v1378, %v1377
      %v1392 = vpack.c.b16 %v1380, %v1379
      %v1393 = vpack.c.b16 %v1382, %v1381
      %v1394 = vpack.c.b16 %v1384, %v1383
      %v1395 = vpack.c.b16 %v1386, %v1385
      %v1396 = vpack.c.b16 %v1388, %v1387
      %1405 = vmatprep.subr.bf16.mxu0 0
      %1406 = vmatpush1.bf16.msra.mxu0 %v1389
      %1407 = vmatprep.subr.bf16.mxu0 0
      %1408 = vmatpush1.bf16.msra.mxu0 %v1390
      %1409 = vmatprep.subr.bf16.mxu0 0
      %1410 = vmatpush1.bf16.msra.mxu0 %v1391
      %1411 = vmatprep.subr.bf16.mxu0 0
      %1412 = vmatpush1.bf16.msra.mxu0 %v1392
      %1413 = vmatprep.subr.bf16.mxu0 0
      %1414 = vmatpush1.bf16.msra.mxu0 %v1393
      %1415 = vmatprep.subr.bf16.mxu0 0
      %1416 = vmatpush1.bf16.msra.mxu0 %v1394
      %1417 = vmatprep.subr.bf16.mxu0 0
      %1418 = vmatpush1.bf16.msra.mxu0 %v1395
      %1419 = vmatprep.subr.bf16.mxu0 0
      %1420 = vmatpush1.bf16.msra.mxu0 %v1396
      %1421 = vmatprep.subr.bf16.mxu0 0
      %1422 = vmatpush1.bf16.msra.mxu0 0
      %1423 = vmatprep.subr.bf16.mxu0 0
      %1424 = vmatpush1.bf16.msra.mxu0 0
      %1425 = vmatprep.subr.bf16.mxu0 0
      %1426 = vmatpush1.bf16.msra.mxu0 0
      %1427 = vmatprep.subr.bf16.mxu0 0
      %1428 = vmatpush1.bf16.msra.mxu0 0
      %1429 = vmatprep.subr.bf16.mxu0 0
      %1430 = vmatpush1.bf16.msra.mxu0 0
      %1431 = vmatprep.subr.bf16.mxu0 0
      %1432 = vmatpush1.bf16.msra.mxu0 0
      %1433 = vmatprep.subr.bf16.mxu0 0
      %1434 = vmatpush1.bf16.msra.mxu0 0
      %1435 = vmatprep.subr.bf16.mxu0 0
      %1436 = vmatpush1.bf16.msra.mxu0 0
      %1437 = vmatprep.mubr.bf16.mxu0 0
      %1438 = vmatmul.mubr.bf16.gmra.mrb[0].mxu0 %v1354
      %v1439 = vpop.f32.mrb[0].mxu0
      %v1440 = vadd.f32 0.0, %v1439
      %v1441 = vpop.f32.mrb[0].mxu0
      %v1442 = vpop.f32.mrb[0].mxu0
      %v1443 = vadd.f32 0.0, %v1442
      %v1444 = vpop.f32.mrb[0].mxu0
      %1445 = vmatprep.mubr.bf16.mxu0 0
      %1446 = vmatmul.mubr.bf16.gmra.mrb[0].mxu0 %v1353
      %v1447 = vpop.f32.mrb[0].mxu0
      %v1448 = vadd.f32 0.0, %v1447
      %v1449 = vpop.f32.mrb[0].mxu0
      %v1450 = vpop.f32.mrb[0].mxu0
      %v1451 = vpop.f32.mrb[0].mxu0
      %1452 = vdwg.mxu0
      %v1453 = vld [vmem:[#allocation2] sm:$0xff]
      %v1454 = vld [vmem:[#allocation2 + $0x8] sm:$0xff]
      %v1455 = vld [vmem:[#allocation2 + $0x10] sm:$0xf]
      %v1456 = vadd.f32 %v1453, %v1440
      %v1457 = vadd.f32 %v1454, %v1443
      %v1458 = vadd.f32 %v1455, %v1448
      %1459 = vst [vmem:[#allocation2] sm:$0xff] %v1456
      %1460 = vst [vmem:[#allocation2 + $0x8] sm:$0xff] %v1457
      %1461 = vst [vmem:[#allocation2 + $0x10] sm:$0xf] %v1458
      %v1462 = vld [vmem:[#allocation2] sm:$0xff]
      %v1463 = vld [vmem:[#allocation2 + $0x8] sm:$0xff]
      %v1464 = vld [vmem:[#allocation2 + $0x10] sm:$0xf]
      %v1465 = vld [vmem:[%s2] sm:$0x1]
      %v1467 = vlaneseq
      %v1468 = vshrl.u32 %v1467, 7
      %v1469 = vsub.s32 0, %v1468
      %v1470 = vrot.slane %v1465, %v1469
      %v1472 = vadd.f32 %v1462, %v1470
      %v1473 = vadd.f32 %v1463, %v1470
      %v1474 = vadd.f32 %v1464, %v1470
      %v1475 = vmax.f32 %v1472, 0.0
      %v1476 = vmax.f32 %v1473, 0.0
      %v1477 = vmax.f32 %v1474, 0.0
      %v1478 = vpack.c.bf16 %v1476, %v1475
      %v1479 = vpack.c.bf16 %v1477, %v1477
      %v1482 = vunpack.c.l.b16 %v1478
      %v1483 = vunpack.c.h.b16 %v1478
      %v1484 = vunpack.c.l.b16 %v1479
      %v1485 = vpack.c.b16 %v1482, %v1482
      %v1486 = vpack.c.b16 %v1483, %v1483
      %v1487 = vpack.c.b16 %v1484, %v1484
      %1491 = vst [vmem:[%s170] sm:$0xf] %v1485
      %1492 = vst [vmem:[%s170 + $0x4] sm:$0xf] %v1486
      %1493 = vst [vmem:[%s170 + $0x8] sm:$0x3] %v1487
      %p1494 = scmp.lt.s32.totalorder %s14, 1
      %s1495 = scalar_select %p1494, %s14, 1
      %s1496 = smul.addr %s1495, 3
      %s1497 = smul.addr %s1496, 4
      %s1498 = scalar_lea.vmem %s3, %s1497
      // Predicated region
      $region33: #{bottleneck_forward.5} parent=31 // pred_check
        %p1499 = pneg %p100
      $region34: #{bottleneck_forward.5} parent=31 // pred_check_branch
        %1501 = sbr.rel (%p1499) target = $region36
      $region35: #{bottleneck_forward.5} parent=31 // pred_region
        _
      $region36: #{bottleneck_forward.5} parent=31 // pred_fallthru
        _
    $region32: #{bottleneck_forward.5} parent=5 // pred_fallthru
      _
    %p1502 = scmp.le.s32.totalorder 2, %s9
    // Predicated region
    $region37: #{bottleneck_forward.5} parent=5 // pred_check
      %p1503 = pneg %p1502
    $region38: #{bottleneck_forward.5} parent=5 // pred_check_branch
      %1505 = sbr.rel (%p1503) target = $region40
    $region39: #{bottleneck_forward.5} parent=5 // pred_region
      %s1506 = ssub.s32 %s9, 2
      // Predicated region
      $region41: #{bottleneck_forward.5} parent=39 // pred_check
        %p1507 = pneg %p106
      $region42: #{bottleneck_forward.5} parent=39 // pred_check_branch
        %1509 = sbr.rel (%p1507) target = $region44
      $region43: #{bottleneck_forward.5} parent=39 // pred_region
        %p1510 = scmp.lt.s32.totalorder %s15, 1
        %s1511 = scalar_select %p1510, %s15, 1
        %s1512 = smul.addr %s1511, 3
        %s1513 = smul.addr %s1512, 4
        %s1514 = scalar_lea.vmem %s3, %s1513
      $region44: #{bottleneck_forward.5} parent=39 // pred_fallthru
        _
    $region40: #{bottleneck_forward.5} parent=5 // pred_fallthru
      _
  $region6: #{bottleneck_forward.5} parent=0 // loop_footer
    %s13 = sadd.s32 1, %s9
  $region7: #{bottleneck_forward.5} parent=0 // loop_footer_branch
    %8 = sbr.rel target = $region3
  $region8: #{bottleneck_forward.5} parent=0 // loop_exit
    _

</llo_original>
